<compile_context>
chip_gen: v7x
topology: tpu7x:2x2x1
jax: 0.10.0
libtpu: 0.0.40
codegen_flags: <defaults>
</compile_context>

<pallas_src>
import functools

import jax
import jax.numpy as jnp
from jax.experimental import pallas as pl
from jax.experimental.pallas import tpu as pltpu


def _gru_facts_kernel(gi_ref, w_hh_ref, b_hn_ref, out_ref, h_ref, *,
                      num_token, hidden, sent_per_block, unroll):
    """One grid step == `sent_per_block` sentences (sent_per_block*num_token GRU steps).

    PyTorch gate order: r, z, n.  gi already contains
    x @ W_ih^T + b_ih + [b_hr, b_hz, 0]; only b_hn is applied in-kernel
    (it must stay inside the r * (.) term).  `hidden` is the padded size (Hp).
    """
    s_idx = pl.program_id(1)      # sentence-block axis: serial recurrence

    @pl.when(s_idx == 0)
    def _():
        h_ref[...] = jnp.zeros_like(h_ref)

    tb = h_ref.shape[0]
    w_hh = w_hh_ref[...]                                       # (Hp, 3Hp) bf16/f32
    # Hoist the bias broadcast out of the token loop (JAX does not CSE it).
    b_hn = jnp.broadcast_to(b_hn_ref[...], (tb, hidden))       # (tb, Hp) f32

    h = h_ref[...]                                             # (tb, Hp) f32
    for j in range(sent_per_block):                            # static unroll
        def token_step(tok, h, _j=j):
            # gi stream is bf16 in VMEM; upcast once per step, gate math in f32.
            gi = gi_ref[_j * num_token + tok].astype(jnp.float32)   # (tb, 3Hp)
            gh = jnp.dot(h.astype(w_hh.dtype), w_hh,
                         preferred_element_type=jnp.float32)        # (tb, 3Hp) f32
            # Whole-vreg lane slices: hidden is padded to a multiple of 128.
            i_r, i_z, i_n = (gi[:, :hidden], gi[:, hidden:2 * hidden],
                             gi[:, 2 * hidden:])
            h_r, h_z, h_n = (gh[:, :hidden], gh[:, hidden:2 * hidden],
                             gh[:, 2 * hidden:])
            r = jax.nn.sigmoid(i_r + h_r)        # b_hr already folded into gi
            z = jax.nn.sigmoid(i_z + h_z)        # b_hz already folded into gi
            n = jnp.tanh(i_n + r * (h_n + b_hn))
            return n + z * (h - n)               # == (1-z)*n + z*h
        # Partial unroll bounds vreg pressure for large num_token.
        h = jax.lax.fori_loop(0, num_token, token_step, h, unroll=unroll)
        out_ref[j] = h.astype(out_ref.dtype)     # last token of sentence j

    h_ref[...] = h

    # TODO(synk): for H <= 256 on v6e/v7x, drive the MXU weight-stationary
    # (matmul_push_rhs once per grid step + matmul_acc_lhs/pop per token) to
    # drop the per-token weight push from the serial critical path.


def gru_facts(gi, w_hh_t, b_hn, *, num_token, sentences_per_block=1,
              batch_block=None, out_dtype=jnp.float32, token_unroll=8):
    """gi: (seq_len, Bp, 3Hp) precomputed fused input projection (bf16 or f32),
    time-major, batch padded to a multiple of 8, hidden gate-padded to Hp.
    w_hh_t: (Hp, 3Hp) recurrent weights, pre-transposed (bf16 or f32).
    b_hn: (1, Hp) f32 (only the n-gate recurrent bias).
    Returns facts: (num_sentence, Bp, Hp)."""
    seq_len, b_pad, three_h = gi.shape
    hp = w_hh_t.shape[0]
    assert three_h == 3 * hp
    assert seq_len % num_token == 0
    num_sentence = seq_len // num_token
    assert num_sentence % sentences_per_block == 0
    tb = b_pad if batch_block is None else batch_block
    assert b_pad % tb == 0 and (tb == b_pad or tb % 8 == 0)
    nb = b_pad // tb
    ns_blocks = num_sentence // sentences_per_block
    tok_blk = sentences_per_block * num_token

    kernel = functools.partial(_gru_facts_kernel, num_token=num_token,
                               hidden=hp, sent_per_block=sentences_per_block,
                               unroll=min(num_token, token_unroll))

    # Explicit VMEM budget from actual block sizes (gi double-buffered, weights
    # single-buffered, out double-buffered, h scratch), with headroom.  Floor
    # at the v5e default (16 MiB), cap at v7x physical (64 MiB).
    gi_blk = tok_blk * tb * 3 * hp * gi.dtype.itemsize
    w_blk = hp * 3 * hp * jnp.dtype(w_hh_t.dtype).itemsize
    b_blk = 8 * hp * 4                      # (1, Hp) f32, sublane-padded to 8
    out_blk = sentences_per_block * tb * hp * jnp.dtype(out_dtype).itemsize
    h_blk = tb * hp * 4
    vmem_need = 2 * gi_blk + w_blk + b_blk + 2 * out_blk + h_blk
    vmem_limit = int(min(64 << 20, max(2 * vmem_need + (2 << 20), 16 << 20)))

    grid_spec = pltpu.PrefetchScalarGridSpec(
        num_scalar_prefetch=0,
        grid=(nb, ns_blocks),
        in_specs=[
            pl.BlockSpec((tok_blk, tb, 3 * hp), lambda b, s: (s, b, 0)),  # gi
            # Grid-invariant weights/bias: single-buffered.
            pl.BlockSpec((hp, 3 * hp), lambda b, s: (0, 0),
                         pipeline_mode=pl.Buffered(1)),                   # W_hh^T
            pl.BlockSpec((1, hp), lambda b, s: (0, 0),
                         pipeline_mode=pl.Buffered(1)),                   # b_hn
        ],
        out_specs=pl.BlockSpec((sentences_per_block, tb, hp),
                               lambda b, s: (s, b, 0)),
        scratch_shapes=[pltpu.VMEM((tb, hp), jnp.float32)],
    )

    return pl.pallas_call(
        kernel,
        out_shape=jax.ShapeDtypeStruct((num_sentence, b_pad, hp), out_dtype),
        grid_spec=grid_spec,
        compiler_params=pltpu.CompilerParams(
            # Batch blocks are independent (megacore sharding on v7x);
            # the recurrence over sentence blocks is serial.
            dimension_semantics=("parallel", "arbitrary"),
            vmem_limit_bytes=vmem_limit),
    )(gi, w_hh_t, b_hn)


def _pad_gates_last(x, hidden, hp):
    """Pad the last axis from 3*hidden to 3*hp, zero-padding each gate block."""
    if hp == hidden:
        return x
    lead = x.shape[:-1]
    x3 = x.reshape(*lead, 3, hidden)
    x3 = jnp.pad(x3, [(0, 0)] * len(lead) + [(0, 0), (0, hp - hidden)])
    return x3.reshape(*lead, 3 * hp)


def _pad_w_hh(w_hh, hidden, hp):
    """(3H, H) -> (3Hp, Hp), zero-padding each gate block."""
    if hp == hidden:
        return w_hh
    w3 = w_hh.reshape(3, hidden, hidden)
    w3 = jnp.pad(w3, ((0, 0), (0, hp - hidden), (0, hp - hidden)))
    return w3.reshape(3 * hp, hp)


def init_params(key, hidden_size, vocab_size):
    """Deterministic synthetic params matching nn.GRU(hidden, hidden) + embedding."""
    k_emb, k_ih, k_hh, k_bih, k_bhh = jax.random.split(key, 5)
    embedding = jax.random.normal(k_emb, (vocab_size, hidden_size), jnp.float32)
    # xavier_normal for (3H, H) weights: std = sqrt(2 / (fan_in + fan_out))
    std = (2.0 / (hidden_size + 3 * hidden_size)) ** 0.5
    w_ih = std * jax.random.normal(k_ih, (3 * hidden_size, hidden_size), jnp.float32)
    w_hh = std * jax.random.normal(k_hh, (3 * hidden_size, hidden_size), jnp.float32)
    # nn.GRU default bias init: U(-1/sqrt(H), 1/sqrt(H))
    bound = 1.0 / (hidden_size ** 0.5)
    b_ih = jax.random.uniform(k_bih, (3 * hidden_size,), jnp.float32, -bound, bound)
    b_hh = jax.random.uniform(k_bhh, (3 * hidden_size,), jnp.float32, -bound, bound)
    return embedding, w_ih, w_hh, b_ih, b_hh


@functools.partial(jax.jit, static_argnames=("num_token", "matmul_dtype",
                                             "sentences_per_block",
                                             "batch_blocks"))
def input_module_forward(contexts, embedding, w_ih, w_hh, b_ih, b_hh, *,
                         num_token, matmul_dtype=jnp.bfloat16,
                         sentences_per_block=1, batch_blocks=1):
    batch, num_sentence, num_token_ = contexts.shape
    hidden = embedding.shape[1]
    hp = ((hidden + 127) // 128) * 128          # lane-pad hidden per gate
    seq_len = num_sentence * num_token_
    # c = contexts.view(B, -1).transpose_(0, 1)  -> (seq_len, B)
    c = contexts.reshape(batch, seq_len).T

    # Fold b_hr, b_hz into the fused input-side bias (b_hn must stay in-kernel
    # inside the r * (.) term).
    bias_fused = b_ih + jnp.concatenate(
        [b_hh[:2 * hidden], jnp.zeros((hidden,), b_hh.dtype)])
    b_hn = b_hh[2 * hidden:]

    # Fused input projection: gi[t, b] = embedding[c[t, b]] @ W_ih^T + bias.
    # One big MXU matmul on the (vocab, H) table + a gather replaces seq_len
    # tiny per-step input matmuls on the serial critical path.
    prec = (jax.lax.Precision.HIGHEST if matmul_dtype == jnp.float32
            else jax.lax.Precision.DEFAULT)
    emb_proj = jnp.dot(embedding, w_ih.T, preferred_element_type=jnp.float32,
                       precision=prec) + bias_fused             # (vocab, 3H)
    # Gate-pad to 3*Hp and cast to the stream dtype BEFORE the gather so the
    # big gi tensor is bf16 end-to-end (half the HBM/VMEM bytes).
    emb_proj = _pad_gates_last(emb_proj, hidden, hp).astype(matmul_dtype)
    gi = jnp.take(emb_proj, c, axis=0)                          # (seq_len, B, 3Hp)
    # TODO(synk): gather emb_proj rows inside the kernel (scalar-prefetched
    # token ids) to avoid materializing gi in HBM at all (2x HBM traffic today).

    # Dropout(p=0.1) is identity in eval mode.
    # TODO(synk): training-mode dropout acts on `embedded` *before* the input
    # projection, so it cannot use the fused table; not implemented.

    # Pad batch so each batch block is a multiple of 8 rows (f32 sublane).
    # Set batch_blocks=2 on v7x so both TensorCores get an independent shard.
    b_pad = -(-batch // (8 * batch_blocks)) * (8 * batch_blocks)
    if b_pad != batch:
        gi = jnp.pad(gi, ((0, 0), (0, b_pad - batch), (0, 0)))
    batch_block = b_pad // batch_blocks

    # Padded recurrent params (zero rows/cols -> padded hidden units stay 0).
    w_hh_t = _pad_w_hh(w_hh, hidden, hp).T.astype(matmul_dtype)   # (Hp, 3Hp)
    b_hn_p = jnp.pad(b_hn, (0, hp - hidden)).reshape(1, hp).astype(jnp.float32)

    facts = gru_facts(gi, w_hh_t, b_hn_p,
                      num_token=num_token,
                      sentences_per_block=sentences_per_block,
                      batch_block=batch_block)
    return facts[:, :batch, :hidden]            # (num_sentence, B, H)


def reference_forward(contexts, embedding, w_ih, w_hh, b_ih, b_hh, num_token):
    """Pure-JAX f32 reference matching PyTorch nn.GRU semantics (eval mode)."""
    batch = contexts.shape[0]
    hidden = embedding.shape[1]
    c = contexts.reshape(batch, -1).T
    emb = jnp.take(embedding, c, axis=0)

    def step(h, x):
        gi = x @ w_ih.T + b_ih
        gh = h @ w_hh.T + b_hh
        i_r, i_z, i_n = jnp.split(gi, 3, axis=-1)
        h_r, h_z, h_n = jnp.split(gh, 3, axis=-1)
        r = jax.nn.sigmoid(i_r + h_r)
        z = jax.nn.sigmoid(i_z + h_z)
        n = jnp.tanh(i_n + r * h_n)
        h_new = (1.0 - z) * n + z * h
        return h_new, h_new

    h0 = jnp.zeros((batch, hidden), jnp.float32)
    _, hs = jax.lax.scan(step, h0, emb)
    return hs[num_token - 1::num_token]


if __name__ == "__main__":
    hidden_size = 32
    batch = 2
    num_sentence = 4
    num_token = 4
    vocab_size = 50

    key = jax.random.PRNGKey(0)
    k_params, k_ctx = jax.random.split(key)
    embedding, w_ih, w_hh, b_ih, b_hh = init_params(k_params, hidden_size, vocab_size)
    contexts = jax.random.randint(
        k_ctx, (batch, num_sentence, num_token), 0, vocab_size, dtype=jnp.int32)

    # Default path: bf16 gi + bf16 recurrent matmul (f32 accumulation + f32
    # gate math), two sentences per grid step.
    facts = input_module_forward(
        contexts, embedding, w_ih, w_hh, b_ih, b_hh,
        num_token=num_token, sentences_per_block=2)
    jax.block_until_ready(facts)
    assert facts.shape == (num_sentence, batch, hidden_size)

    # Numerics check against a pure-JAX reference.
    ref = reference_forward(contexts, embedding, w_ih, w_hh, b_ih, b_hh, num_token)
    facts_f32 = input_module_forward(
        contexts, embedding, w_ih, w_hh, b_ih, b_hh,
        num_token=num_token, matmul_dtype=jnp.float32, sentences_per_block=1)
    assert jnp.allclose(facts_f32, ref, atol=1e-3, rtol=1e-3)
    assert jnp.allclose(facts, ref, atol=5e-2, rtol=5e-2)

    print("KERNEL_OK")
</pallas_src>

<mosaic_0001>
module attributes {stable_mosaic.version = 11 : i64} {
  func.func @_gru_facts_kernel(%arg0: i32, %arg1: i32, %arg2: memref<8x8x384xbf16, #tpu.memory_space<vmem>>, %arg3: memref<128x384xbf16, #tpu.memory_space<vmem>>, %arg4: memref<1x128xf32, #tpu.memory_space<vmem>>, %arg5: memref<2x8x128xf32, #tpu.memory_space<vmem>>, %arg6: memref<8x128xf32, #tpu.memory_space<vmem>>) attributes {dimension_semantics = [#tpu.dimension_semantics<parallel>, #tpu.dimension_semantics<arbitrary>], iteration_bounds = array<i64: 1, 2>, scalar_prefetch = 0 : i64, scratch_operands = 1 : i64, tpu.core_type = #tpu.core_type<tc>, window_params = [{transform_indices = @transform_0, window_bounds = array<i64: 8, 8, 384>}, {pipeline_mode = #tpu.pipeline_mode<synchronous>, transform_indices = @transform_1, window_bounds = array<i64: 128, 384>}, {pipeline_mode = #tpu.pipeline_mode<synchronous>, transform_indices = @transform_2, window_bounds = array<i64: 1, 128>}, {transform_indices = @transform_3, window_bounds = array<i64: 2, 8, 128>}]} {
    %c0_i32 = arith.constant 0 : i32
    %0 = arith.cmpi eq, %arg1, %c0_i32 : i32
    %1 = arith.extui %0 : i1 to i32
    %c0_i32_0 = arith.constant 0 : i32
    %2 = arith.cmpi ne, %1, %c0_i32_0 : i32
    scf.if %2 {
      %cst_66 = arith.constant 0.000000e+00 : f32
      %271 = vector.broadcast %cst_66 : f32 to vector<8x128xf32>
      %c0_67 = arith.constant 0 : index
      %c0_68 = arith.constant 0 : index
      %272 = vector.load %arg6[%c0_67, %c0_68] : memref<8x128xf32, #tpu.memory_space<vmem>>, vector<8x128xf32>
      tpu.vector_store %arg6[%c0_67, %c0_68], %271 {strides = array<i32>} : memref<8x128xf32, #tpu.memory_space<vmem>>, vector<8x128xf32>,
    } else {
    }
    %c0 = arith.constant 0 : index
    %c0_1 = arith.constant 0 : index
    %3 = vector.load %arg3[%c0, %c0_1] : memref<128x384xbf16, #tpu.memory_space<vmem>>, vector<128x384xbf16>
    %c0_2 = arith.constant 0 : index
    %c0_3 = arith.constant 0 : index
    %4 = vector.load %arg4[%c0_2, %c0_3] : memref<1x128xf32, #tpu.memory_space<vmem>>, vector<1x128xf32>
    %5 = vector.shape_cast %4 : vector<1x128xf32> to vector<1x128xf32>
    %6 = vector.broadcast %5 : vector<1x128xf32> to vector<8x128xf32>
    %c0_4 = arith.constant 0 : index
    %c0_5 = arith.constant 0 : index
    %7 = vector.load %arg6[%c0_4, %c0_5] : memref<8x128xf32, #tpu.memory_space<vmem>>, vector<8x128xf32>
    %c0_i32_6 = arith.constant 0 : i32
    %c0_i32_7 = arith.constant 0 : i32
    %8 = arith.addi %c0_i32_7, %c0_i32_6 : i32
    %9 = arith.index_cast %8 : i32 to index
    %c0_8 = arith.constant 0 : index
    %c0_9 = arith.constant 0 : index
    %10 = vector.load %arg2[%9, %c0_8, %c0_9] : memref<8x8x384xbf16, #tpu.memory_space<vmem>>, vector<1x8x384xbf16>
    %11 = vector.shape_cast %10 : vector<1x8x384xbf16> to vector<8x384xbf16>
    %12 = arith.extf %11 : vector<8x384xbf16> to vector<8x384xf32>
    %13 = arith.truncf %7 : vector<8x128xf32> to vector<8x128xbf16>
    %cst = arith.constant dense<0.000000e+00> : vector<8x384xf32>
    %14 = tpu.matmul %13, %3, %cst {dimension_numbers = #tpu.dot_dimension_numbers<[1], [0], [0], [1], [0, 0, 1, 1], [], []>} : vector<8x128xbf16>, vector<128x384xbf16>, vector<8x384xf32> -> vector<8x384xf32>
    %15 = vector.extract_strided_slice %12 {offsets = [0, 0], sizes = [8, 128], strides = [1, 1]} : vector<8x384xf32> to vector<8x128xf32>
    %16 = vector.extract_strided_slice %12 {offsets = [0, 128], sizes = [8, 128], strides = [1, 1]} : vector<8x384xf32> to vector<8x128xf32>
    %17 = vector.extract_strided_slice %12 {offsets = [0, 256], sizes = [8, 128], strides = [1, 1]} : vector<8x384xf32> to vector<8x128xf32>
    %18 = vector.extract_strided_slice %14 {offsets = [0, 0], sizes = [8, 128], strides = [1, 1]} : vector<8x384xf32> to vector<8x128xf32>
    %19 = vector.extract_strided_slice %14 {offsets = [0, 128], sizes = [8, 128], strides = [1, 1]} : vector<8x384xf32> to vector<8x128xf32>
    %20 = vector.extract_strided_slice %14 {offsets = [0, 256], sizes = [8, 128], strides = [1, 1]} : vector<8x384xf32> to vector<8x128xf32>
    %21 = arith.addf %15, %18 : vector<8x128xf32>
    %22 = arith.negf %21 : vector<8x128xf32>
    %23 = math.exp %22 : vector<8x128xf32>
    %cst_10 = arith.constant 1.000000e+00 : f32
    %24 = vector.broadcast %cst_10 : f32 to vector<8x128xf32>
    %25 = arith.addf %24, %23 : vector<8x128xf32>
    %26 = arith.divf %24, %25 : vector<8x128xf32>
    %27 = arith.addf %16, %19 : vector<8x128xf32>
    %28 = arith.negf %27 : vector<8x128xf32>
    %29 = math.exp %28 : vector<8x128xf32>
    %cst_11 = arith.constant 1.000000e+00 : f32
    %30 = vector.broadcast %cst_11 : f32 to vector<8x128xf32>
    %31 = arith.addf %30, %29 : vector<8x128xf32>
    %32 = arith.divf %30, %31 : vector<8x128xf32>
    %33 = arith.addf %20, %6 : vector<8x128xf32>
    %34 = arith.mulf %26, %33 : vector<8x128xf32>
    %35 = arith.addf %17, %34 : vector<8x128xf32>
    %36 = math.tanh %35 : vector<8x128xf32>
    %37 = arith.subf %7, %36 : vector<8x128xf32>
    %38 = arith.mulf %32, %37 : vector<8x128xf32>
    %39 = arith.addf %36, %38 : vector<8x128xf32>
    %c1_i32 = arith.constant 1 : i32
    %c0_i32_12 = arith.constant 0 : i32
    %40 = arith.addi %c0_i32_12, %c1_i32 : i32
    %41 = arith.index_cast %40 : i32 to index
    %c0_13 = arith.constant 0 : index
    %c0_14 = arith.constant 0 : index
    %42 = vector.load %arg2[%41, %c0_13, %c0_14] : memref<8x8x384xbf16, #tpu.memory_space<vmem>>, vector<1x8x384xbf16>
    %43 = vector.shape_cast %42 : vector<1x8x384xbf16> to vector<8x384xbf16>
    %44 = arith.extf %43 : vector<8x384xbf16> to vector<8x384xf32>
    %45 = arith.truncf %39 : vector<8x128xf32> to vector<8x128xbf16>
    %cst_15 = arith.constant dense<0.000000e+00> : vector<8x384xf32>
    %46 = tpu.matmul %45, %3, %cst_15 {dimension_numbers = #tpu.dot_dimension_numbers<[1], [0], [0], [1], [0, 0, 1, 1], [], []>} : vector<8x128xbf16>, vector<128x384xbf16>, vector<8x384xf32> -> vector<8x384xf32>
    %47 = vector.extract_strided_slice %44 {offsets = [0, 0], sizes = [8, 128], strides = [1, 1]} : vector<8x384xf32> to vector<8x128xf32>
    %48 = vector.extract_strided_slice %44 {offsets = [0, 128], sizes = [8, 128], strides = [1, 1]} : vector<8x384xf32> to vector<8x128xf32>
    %49 = vector.extract_strided_slice %44 {offsets = [0, 256], sizes = [8, 128], strides = [1, 1]} : vector<8x384xf32> to vector<8x128xf32>
    %50 = vector.extract_strided_slice %46 {offsets = [0, 0], sizes = [8, 128], strides = [1, 1]} : vector<8x384xf32> to vector<8x128xf32>
    %51 = vector.extract_strided_slice %46 {offsets = [0, 128], sizes = [8, 128], strides = [1, 1]} : vector<8x384xf32> to vector<8x128xf32>
    %52 = vector.extract_strided_slice %46 {offsets = [0, 256], sizes = [8, 128], strides = [1, 1]} : vector<8x384xf32> to vector<8x128xf32>
    %53 = arith.addf %47, %50 : vector<8x128xf32>
    %54 = arith.negf %53 : vector<8x128xf32>
    %55 = math.exp %54 : vector<8x128xf32>
    %cst_16 = arith.constant 1.000000e+00 : f32
    %56 = vector.broadcast %cst_16 : f32 to vector<8x128xf32>
    %57 = arith.addf %56, %55 : vector<8x128xf32>
    %58 = arith.divf %56, %57 : vector<8x128xf32>
    %59 = arith.addf %48, %51 : vector<8x128xf32>
    %60 = arith.negf %59 : vector<8x128xf32>
    %61 = math.exp %60 : vector<8x128xf32>
    %cst_17 = arith.constant 1.000000e+00 : f32
    %62 = vector.broadcast %cst_17 : f32 to vector<8x128xf32>
    %63 = arith.addf %62, %61 : vector<8x128xf32>
    %64 = arith.divf %62, %63 : vector<8x128xf32>
    %65 = arith.addf %52, %6 : vector<8x128xf32>
    %66 = arith.mulf %58, %65 : vector<8x128xf32>
    %67 = arith.addf %49, %66 : vector<8x128xf32>
    %68 = math.tanh %67 : vector<8x128xf32>
    %69 = arith.subf %39, %68 : vector<8x128xf32>
    %70 = arith.mulf %64, %69 : vector<8x128xf32>
    %71 = arith.addf %68, %70 : vector<8x128xf32>
    %c2_i32 = arith.constant 2 : i32
    %c0_i32_18 = arith.constant 0 : i32
    %72 = arith.addi %c0_i32_18, %c2_i32 : i32
    %73 = arith.index_cast %72 : i32 to index
    %c0_19 = arith.constant 0 : index
    %c0_20 = arith.constant 0 : index
    %74 = vector.load %arg2[%73, %c0_19, %c0_20] : memref<8x8x384xbf16, #tpu.memory_space<vmem>>, vector<1x8x384xbf16>
    %75 = vector.shape_cast %74 : vector<1x8x384xbf16> to vector<8x384xbf16>
    %76 = arith.extf %75 : vector<8x384xbf16> to vector<8x384xf32>
    %77 = arith.truncf %71 : vector<8x128xf32> to vector<8x128xbf16>
    %cst_21 = arith.constant dense<0.000000e+00> : vector<8x384xf32>
    %78 = tpu.matmul %77, %3, %cst_21 {dimension_numbers = #tpu.dot_dimension_numbers<[1], [0], [0], [1], [0, 0, 1, 1], [], []>} : vector<8x128xbf16>, vector<128x384xbf16>, vector<8x384xf32> -> vector<8x384xf32>
    %79 = vector.extract_strided_slice %76 {offsets = [0, 0], sizes = [8, 128], strides = [1, 1]} : vector<8x384xf32> to vector<8x128xf32>
    %80 = vector.extract_strided_slice %76 {offsets = [0, 128], sizes = [8, 128], strides = [1, 1]} : vector<8x384xf32> to vector<8x128xf32>
    %81 = vector.extract_strided_slice %76 {offsets = [0, 256], sizes = [8, 128], strides = [1, 1]} : vector<8x384xf32> to vector<8x128xf32>
    %82 = vector.extract_strided_slice %78 {offsets = [0, 0], sizes = [8, 128], strides = [1, 1]} : vector<8x384xf32> to vector<8x128xf32>
    %83 = vector.extract_strided_slice %78 {offsets = [0, 128], sizes = [8, 128], strides = [1, 1]} : vector<8x384xf32> to vector<8x128xf32>
    %84 = vector.extract_strided_slice %78 {offsets = [0, 256], sizes = [8, 128], strides = [1, 1]} : vector<8x384xf32> to vector<8x128xf32>
    %85 = arith.addf %79, %82 : vector<8x128xf32>
    %86 = arith.negf %85 : vector<8x128xf32>
    %87 = math.exp %86 : vector<8x128xf32>
    %cst_22 = arith.constant 1.000000e+00 : f32
    %88 = vector.broadcast %cst_22 : f32 to vector<8x128xf32>
    %89 = arith.addf %88, %87 : vector<8x128xf32>
    %90 = arith.divf %88, %89 : vector<8x128xf32>
    %91 = arith.addf %80, %83 : vector<8x128xf32>
    %92 = arith.negf %91 : vector<8x128xf32>
    %93 = math.exp %92 : vector<8x128xf32>
    %cst_23 = arith.constant 1.000000e+00 : f32
    %94 = vector.broadcast %cst_23 : f32 to vector<8x128xf32>
    %95 = arith.addf %94, %93 : vector<8x128xf32>
    %96 = arith.divf %94, %95 : vector<8x128xf32>
    %97 = arith.addf %84, %6 : vector<8x128xf32>
    %98 = arith.mulf %90, %97 : vector<8x128xf32>
    %99 = arith.addf %81, %98 : vector<8x128xf32>
    %100 = math.tanh %99 : vector<8x128xf32>
    %101 = arith.subf %71, %100 : vector<8x128xf32>
    %102 = arith.mulf %96, %101 : vector<8x128xf32>
    %103 = arith.addf %100, %102 : vector<8x128xf32>
    %c3_i32 = arith.constant 3 : i32
    %c0_i32_24 = arith.constant 0 : i32
    %104 = arith.addi %c0_i32_24, %c3_i32 : i32
    %105 = arith.index_cast %104 : i32 to index
    %c0_25 = arith.constant 0 : index
    %c0_26 = arith.constant 0 : index
    %106 = vector.load %arg2[%105, %c0_25, %c0_26] : memref<8x8x384xbf16, #tpu.memory_space<vmem>>, vector<1x8x384xbf16>
    %107 = vector.shape_cast %106 : vector<1x8x384xbf16> to vector<8x384xbf16>
    %108 = arith.extf %107 : vector<8x384xbf16> to vector<8x384xf32>
    %109 = arith.truncf %103 : vector<8x128xf32> to vector<8x128xbf16>
    %cst_27 = arith.constant dense<0.000000e+00> : vector<8x384xf32>
    %110 = tpu.matmul %109, %3, %cst_27 {dimension_numbers = #tpu.dot_dimension_numbers<[1], [0], [0], [1], [0, 0, 1, 1], [], []>} : vector<8x128xbf16>, vector<128x384xbf16>, vector<8x384xf32> -> vector<8x384xf32>
    %111 = vector.extract_strided_slice %108 {offsets = [0, 0], sizes = [8, 128], strides = [1, 1]} : vector<8x384xf32> to vector<8x128xf32>
    %112 = vector.extract_strided_slice %108 {offsets = [0, 128], sizes = [8, 128], strides = [1, 1]} : vector<8x384xf32> to vector<8x128xf32>
    %113 = vector.extract_strided_slice %108 {offsets = [0, 256], sizes = [8, 128], strides = [1, 1]} : vector<8x384xf32> to vector<8x128xf32>
    %114 = vector.extract_strided_slice %110 {offsets = [0, 0], sizes = [8, 128], strides = [1, 1]} : vector<8x384xf32> to vector<8x128xf32>
    %115 = vector.extract_strided_slice %110 {offsets = [0, 128], sizes = [8, 128], strides = [1, 1]} : vector<8x384xf32> to vector<8x128xf32>
    %116 = vector.extract_strided_slice %110 {offsets = [0, 256], sizes = [8, 128], strides = [1, 1]} : vector<8x384xf32> to vector<8x128xf32>
    %117 = arith.addf %111, %114 : vector<8x128xf32>
    %118 = arith.negf %117 : vector<8x128xf32>
    %119 = math.exp %118 : vector<8x128xf32>
    %cst_28 = arith.constant 1.000000e+00 : f32
    %120 = vector.broadcast %cst_28 : f32 to vector<8x128xf32>
    %121 = arith.addf %120, %119 : vector<8x128xf32>
    %122 = arith.divf %120, %121 : vector<8x128xf32>
    %123 = arith.addf %112, %115 : vector<8x128xf32>
    %124 = arith.negf %123 : vector<8x128xf32>
    %125 = math.exp %124 : vector<8x128xf32>
    %cst_29 = arith.constant 1.000000e+00 : f32
    %126 = vector.broadcast %cst_29 : f32 to vector<8x128xf32>
    %127 = arith.addf %126, %125 : vector<8x128xf32>
    %128 = arith.divf %126, %127 : vector<8x128xf32>
    %129 = arith.addf %116, %6 : vector<8x128xf32>
    %130 = arith.mulf %122, %129 : vector<8x128xf32>
    %131 = arith.addf %113, %130 : vector<8x128xf32>
    %132 = math.tanh %131 : vector<8x128xf32>
    %133 = arith.subf %103, %132 : vector<8x128xf32>
    %134 = arith.mulf %128, %133 : vector<8x128xf32>
    %135 = arith.addf %132, %134 : vector<8x128xf32>
    %c4_i32 = arith.constant 4 : i32
    %c0_30 = arith.constant 0 : index
    %c0_31 = arith.constant 0 : index
    %c0_32 = arith.constant 0 : index
    %136 = vector.load %arg5[%c0_30, %c0_31, %c0_32] : memref<2x8x128xf32, #tpu.memory_space<vmem>>, vector<1x8x128xf32>
    %137 = vector.shape_cast %136 : vector<1x8x128xf32> to vector<8x128xf32>
    %138 = vector.shape_cast %135 : vector<8x128xf32> to vector<1x8x128xf32>
    tpu.vector_store %arg5[%c0_30, %c0_31, %c0_32], %138 {strides = array<i32>} : memref<2x8x128xf32, #tpu.memory_space<vmem>>, vector<1x8x128xf32>,
    %c0_i32_33 = arith.constant 0 : i32
    %c4_i32_34 = arith.constant 4 : i32
    %139 = arith.addi %c4_i32_34, %c0_i32_33 : i32
    %140 = arith.index_cast %139 : i32 to index
    %c0_35 = arith.constant 0 : index
    %c0_36 = arith.constant 0 : index
    %141 = vector.load %arg2[%140, %c0_35, %c0_36] : memref<8x8x384xbf16, #tpu.memory_space<vmem>>, vector<1x8x384xbf16>
    %142 = vector.shape_cast %141 : vector<1x8x384xbf16> to vector<8x384xbf16>
    %143 = arith.extf %142 : vector<8x384xbf16> to vector<8x384xf32>
    %144 = arith.truncf %135 : vector<8x128xf32> to vector<8x128xbf16>
    %cst_37 = arith.constant dense<0.000000e+00> : vector<8x384xf32>
    %145 = tpu.matmul %144, %3, %cst_37 {dimension_numbers = #tpu.dot_dimension_numbers<[1], [0], [0], [1], [0, 0, 1, 1], [], []>} : vector<8x128xbf16>, vector<128x384xbf16>, vector<8x384xf32> -> vector<8x384xf32>
    %146 = vector.extract_strided_slice %143 {offsets = [0, 0], sizes = [8, 128], strides = [1, 1]} : vector<8x384xf32> to vector<8x128xf32>
    %147 = vector.extract_strided_slice %143 {offsets = [0, 128], sizes = [8, 128], strides = [1, 1]} : vector<8x384xf32> to vector<8x128xf32>
    %148 = vector.extract_strided_slice %143 {offsets = [0, 256], sizes = [8, 128], strides = [1, 1]} : vector<8x384xf32> to vector<8x128xf32>
    %149 = vector.extract_strided_slice %145 {offsets = [0, 0], sizes = [8, 128], strides = [1, 1]} : vector<8x384xf32> to vector<8x128xf32>
    %150 = vector.extract_strided_slice %145 {offsets = [0, 128], sizes = [8, 128], strides = [1, 1]} : vector<8x384xf32> to vector<8x128xf32>
    %151 = vector.extract_strided_slice %145 {offsets = [0, 256], sizes = [8, 128], strides = [1, 1]} : vector<8x384xf32> to vector<8x128xf32>
    %152 = arith.addf %146, %149 : vector<8x128xf32>
    %153 = arith.negf %152 : vector<8x128xf32>
    %154 = math.exp %153 : vector<8x128xf32>
    %cst_38 = arith.constant 1.000000e+00 : f32
    %155 = vector.broadcast %cst_38 : f32 to vector<8x128xf32>
    %156 = arith.addf %155, %154 : vector<8x128xf32>
    %157 = arith.divf %155, %156 : vector<8x128xf32>
    %158 = arith.addf %147, %150 : vector<8x128xf32>
    %159 = arith.negf %158 : vector<8x128xf32>
    %160 = math.exp %159 : vector<8x128xf32>
    %cst_39 = arith.constant 1.000000e+00 : f32
    %161 = vector.broadcast %cst_39 : f32 to vector<8x128xf32>
    %162 = arith.addf %161, %160 : vector<8x128xf32>
    %163 = arith.divf %161, %162 : vector<8x128xf32>
    %164 = arith.addf %151, %6 : vector<8x128xf32>
    %165 = arith.mulf %157, %164 : vector<8x128xf32>
    %166 = arith.addf %148, %165 : vector<8x128xf32>
    %167 = math.tanh %166 : vector<8x128xf32>
    %168 = arith.subf %135, %167 : vector<8x128xf32>
    %169 = arith.mulf %163, %168 : vector<8x128xf32>
    %170 = arith.addf %167, %169 : vector<8x128xf32>
    %c1_i32_40 = arith.constant 1 : i32
    %c4_i32_41 = arith.constant 4 : i32
    %171 = arith.addi %c4_i32_41, %c1_i32_40 : i32
    %172 = arith.index_cast %171 : i32 to index
    %c0_42 = arith.constant 0 : index
    %c0_43 = arith.constant 0 : index
    %173 = vector.load %arg2[%172, %c0_42, %c0_43] : memref<8x8x384xbf16, #tpu.memory_space<vmem>>, vector<1x8x384xbf16>
    %174 = vector.shape_cast %173 : vector<1x8x384xbf16> to vector<8x384xbf16>
    %175 = arith.extf %174 : vector<8x384xbf16> to vector<8x384xf32>
    %176 = arith.truncf %170 : vector<8x128xf32> to vector<8x128xbf16>
    %cst_44 = arith.constant dense<0.000000e+00> : vector<8x384xf32>
    %177 = tpu.matmul %176, %3, %cst_44 {dimension_numbers = #tpu.dot_dimension_numbers<[1], [0], [0], [1], [0, 0, 1, 1], [], []>} : vector<8x128xbf16>, vector<128x384xbf16>, vector<8x384xf32> -> vector<8x384xf32>
    %178 = vector.extract_strided_slice %175 {offsets = [0, 0], sizes = [8, 128], strides = [1, 1]} : vector<8x384xf32> to vector<8x128xf32>
    %179 = vector.extract_strided_slice %175 {offsets = [0, 128], sizes = [8, 128], strides = [1, 1]} : vector<8x384xf32> to vector<8x128xf32>
    %180 = vector.extract_strided_slice %175 {offsets = [0, 256], sizes = [8, 128], strides = [1, 1]} : vector<8x384xf32> to vector<8x128xf32>
    %181 = vector.extract_strided_slice %177 {offsets = [0, 0], sizes = [8, 128], strides = [1, 1]} : vector<8x384xf32> to vector<8x128xf32>
    %182 = vector.extract_strided_slice %177 {offsets = [0, 128], sizes = [8, 128], strides = [1, 1]} : vector<8x384xf32> to vector<8x128xf32>
    %183 = vector.extract_strided_slice %177 {offsets = [0, 256], sizes = [8, 128], strides = [1, 1]} : vector<8x384xf32> to vector<8x128xf32>
    %184 = arith.addf %178, %181 : vector<8x128xf32>
    %185 = arith.negf %184 : vector<8x128xf32>
    %186 = math.exp %185 : vector<8x128xf32>
    %cst_45 = arith.constant 1.000000e+00 : f32
    %187 = vector.broadcast %cst_45 : f32 to vector<8x128xf32>
    %188 = arith.addf %187, %186 : vector<8x128xf32>
    %189 = arith.divf %187, %188 : vector<8x128xf32>
    %190 = arith.addf %179, %182 : vector<8x128xf32>
    %191 = arith.negf %190 : vector<8x128xf32>
    %192 = math.exp %191 : vector<8x128xf32>
    %cst_46 = arith.constant 1.000000e+00 : f32
    %193 = vector.broadcast %cst_46 : f32 to vector<8x128xf32>
    %194 = arith.addf %193, %192 : vector<8x128xf32>
    %195 = arith.divf %193, %194 : vector<8x128xf32>
    %196 = arith.addf %183, %6 : vector<8x128xf32>
    %197 = arith.mulf %189, %196 : vector<8x128xf32>
    %198 = arith.addf %180, %197 : vector<8x128xf32>
    %199 = math.tanh %198 : vector<8x128xf32>
    %200 = arith.subf %170, %199 : vector<8x128xf32>
    %201 = arith.mulf %195, %200 : vector<8x128xf32>
    %202 = arith.addf %199, %201 : vector<8x128xf32>
    %c2_i32_47 = arith.constant 2 : i32
    %c4_i32_48 = arith.constant 4 : i32
    %203 = arith.addi %c4_i32_48, %c2_i32_47 : i32
    %204 = arith.index_cast %203 : i32 to index
    %c0_49 = arith.constant 0 : index
    %c0_50 = arith.constant 0 : index
    %205 = vector.load %arg2[%204, %c0_49, %c0_50] : memref<8x8x384xbf16, #tpu.memory_space<vmem>>, vector<1x8x384xbf16>
    %206 = vector.shape_cast %205 : vector<1x8x384xbf16> to vector<8x384xbf16>
    %207 = arith.extf %206 : vector<8x384xbf16> to vector<8x384xf32>
    %208 = arith.truncf %202 : vector<8x128xf32> to vector<8x128xbf16>
    %cst_51 = arith.constant dense<0.000000e+00> : vector<8x384xf32>
    %209 = tpu.matmul %208, %3, %cst_51 {dimension_numbers = #tpu.dot_dimension_numbers<[1], [0], [0], [1], [0, 0, 1, 1], [], []>} : vector<8x128xbf16>, vector<128x384xbf16>, vector<8x384xf32> -> vector<8x384xf32>
    %210 = vector.extract_strided_slice %207 {offsets = [0, 0], sizes = [8, 128], strides = [1, 1]} : vector<8x384xf32> to vector<8x128xf32>
    %211 = vector.extract_strided_slice %207 {offsets = [0, 128], sizes = [8, 128], strides = [1, 1]} : vector<8x384xf32> to vector<8x128xf32>
    %212 = vector.extract_strided_slice %207 {offsets = [0, 256], sizes = [8, 128], strides = [1, 1]} : vector<8x384xf32> to vector<8x128xf32>
    %213 = vector.extract_strided_slice %209 {offsets = [0, 0], sizes = [8, 128], strides = [1, 1]} : vector<8x384xf32> to vector<8x128xf32>
    %214 = vector.extract_strided_slice %209 {offsets = [0, 128], sizes = [8, 128], strides = [1, 1]} : vector<8x384xf32> to vector<8x128xf32>
    %215 = vector.extract_strided_slice %209 {offsets = [0, 256], sizes = [8, 128], strides = [1, 1]} : vector<8x384xf32> to vector<8x128xf32>
    %216 = arith.addf %210, %213 : vector<8x128xf32>
    %217 = arith.negf %216 : vector<8x128xf32>
    %218 = math.exp %217 : vector<8x128xf32>
    %cst_52 = arith.constant 1.000000e+00 : f32
    %219 = vector.broadcast %cst_52 : f32 to vector<8x128xf32>
    %220 = arith.addf %219, %218 : vector<8x128xf32>
    %221 = arith.divf %219, %220 : vector<8x128xf32>
    %222 = arith.addf %211, %214 : vector<8x128xf32>
    %223 = arith.negf %222 : vector<8x128xf32>
    %224 = math.exp %223 : vector<8x128xf32>
    %cst_53 = arith.constant 1.000000e+00 : f32
    %225 = vector.broadcast %cst_53 : f32 to vector<8x128xf32>
    %226 = arith.addf %225, %224 : vector<8x128xf32>
    %227 = arith.divf %225, %226 : vector<8x128xf32>
    %228 = arith.addf %215, %6 : vector<8x128xf32>
    %229 = arith.mulf %221, %228 : vector<8x128xf32>
    %230 = arith.addf %212, %229 : vector<8x128xf32>
    %231 = math.tanh %230 : vector<8x128xf32>
    %232 = arith.subf %202, %231 : vector<8x128xf32>
    %233 = arith.mulf %227, %232 : vector<8x128xf32>
    %234 = arith.addf %231, %233 : vector<8x128xf32>
    %c3_i32_54 = arith.constant 3 : i32
    %c4_i32_55 = arith.constant 4 : i32
    %235 = arith.addi %c4_i32_55, %c3_i32_54 : i32
    %236 = arith.index_cast %235 : i32 to index
    %c0_56 = arith.constant 0 : index
    %c0_57 = arith.constant 0 : index
    %237 = vector.load %arg2[%236, %c0_56, %c0_57] : memref<8x8x384xbf16, #tpu.memory_space<vmem>>, vector<1x8x384xbf16>
    %238 = vector.shape_cast %237 : vector<1x8x384xbf16> to vector<8x384xbf16>
    %239 = arith.extf %238 : vector<8x384xbf16> to vector<8x384xf32>
    %240 = arith.truncf %234 : vector<8x128xf32> to vector<8x128xbf16>
    %cst_58 = arith.constant dense<0.000000e+00> : vector<8x384xf32>
    %241 = tpu.matmul %240, %3, %cst_58 {dimension_numbers = #tpu.dot_dimension_numbers<[1], [0], [0], [1], [0, 0, 1, 1], [], []>} : vector<8x128xbf16>, vector<128x384xbf16>, vector<8x384xf32> -> vector<8x384xf32>
    %242 = vector.extract_strided_slice %239 {offsets = [0, 0], sizes = [8, 128], strides = [1, 1]} : vector<8x384xf32> to vector<8x128xf32>
    %243 = vector.extract_strided_slice %239 {offsets = [0, 128], sizes = [8, 128], strides = [1, 1]} : vector<8x384xf32> to vector<8x128xf32>
    %244 = vector.extract_strided_slice %239 {offsets = [0, 256], sizes = [8, 128], strides = [1, 1]} : vector<8x384xf32> to vector<8x128xf32>
    %245 = vector.extract_strided_slice %241 {offsets = [0, 0], sizes = [8, 128], strides = [1, 1]} : vector<8x384xf32> to vector<8x128xf32>
    %246 = vector.extract_strided_slice %241 {offsets = [0, 128], sizes = [8, 128], strides = [1, 1]} : vector<8x384xf32> to vector<8x128xf32>
    %247 = vector.extract_strided_slice %241 {offsets = [0, 256], sizes = [8, 128], strides = [1, 1]} : vector<8x384xf32> to vector<8x128xf32>
    %248 = arith.addf %242, %245 : vector<8x128xf32>
    %249 = arith.negf %248 : vector<8x128xf32>
    %250 = math.exp %249 : vector<8x128xf32>
    %cst_59 = arith.constant 1.000000e+00 : f32
    %251 = vector.broadcast %cst_59 : f32 to vector<8x128xf32>
    %252 = arith.addf %251, %250 : vector<8x128xf32>
    %253 = arith.divf %251, %252 : vector<8x128xf32>
    %254 = arith.addf %243, %246 : vector<8x128xf32>
    %255 = arith.negf %254 : vector<8x128xf32>
    %256 = math.exp %255 : vector<8x128xf32>
    %cst_60 = arith.constant 1.000000e+00 : f32
    %257 = vector.broadcast %cst_60 : f32 to vector<8x128xf32>
    %258 = arith.addf %257, %256 : vector<8x128xf32>
    %259 = arith.divf %257, %258 : vector<8x128xf32>
    %260 = arith.addf %247, %6 : vector<8x128xf32>
    %261 = arith.mulf %253, %260 : vector<8x128xf32>
    %262 = arith.addf %244, %261 : vector<8x128xf32>
    %263 = math.tanh %262 : vector<8x128xf32>
    %264 = arith.subf %234, %263 : vector<8x128xf32>
    %265 = arith.mulf %259, %264 : vector<8x128xf32>
    %266 = arith.addf %263, %265 : vector<8x128xf32>
    %c4_i32_61 = arith.constant 4 : i32
    %c1 = arith.constant 1 : index
    %c0_62 = arith.constant 0 : index
    %c0_63 = arith.constant 0 : index
    %267 = vector.load %arg5[%c1, %c0_62, %c0_63] : memref<2x8x128xf32, #tpu.memory_space<vmem>>, vector<1x8x128xf32>
    %268 = vector.shape_cast %267 : vector<1x8x128xf32> to vector<8x128xf32>
    %269 = vector.shape_cast %266 : vector<8x128xf32> to vector<1x8x128xf32>
    tpu.vector_store %arg5[%c1, %c0_62, %c0_63], %269 {strides = array<i32>} : memref<2x8x128xf32, #tpu.memory_space<vmem>>, vector<1x8x128xf32>,
    %c0_64 = arith.constant 0 : index
    %c0_65 = arith.constant 0 : index
    %270 = vector.load %arg6[%c0_64, %c0_65] : memref<8x128xf32, #tpu.memory_space<vmem>>, vector<8x128xf32>
    tpu.vector_store %arg6[%c0_64, %c0_65], %266 {strides = array<i32>} : memref<8x128xf32, #tpu.memory_space<vmem>>, vector<8x128xf32>,
    return
  }
  func.func @transform_0(%arg0: i32, %arg1: i32) -> (i32, i32, i32) {
    %c0_i32 = arith.constant 0 : i32
    %c0_i32_0 = arith.constant 0 : i32
    return %arg1, %arg0, %c0_i32 : i32, i32, i32
  }
  func.func @transform_1(%arg0: i32, %arg1: i32) -> (i32, i32) {
    %c0_i32 = arith.constant 0 : i32
    %c0_i32_0 = arith.constant 0 : i32
    %c0_i32_1 = arith.constant 0 : i32
    return %c0_i32, %c0_i32_0 : i32, i32
  }
  func.func @transform_2(%arg0: i32, %arg1: i32) -> (i32, i32) {
    %c0_i32 = arith.constant 0 : i32
    %c0_i32_0 = arith.constant 0 : i32
    %c0_i32_1 = arith.constant 0 : i32
    return %c0_i32, %c0_i32_0 : i32, i32
  }
  func.func @transform_3(%arg0: i32, %arg1: i32) -> (i32, i32, i32) {
    %c0_i32 = arith.constant 0 : i32
    %c0_i32_0 = arith.constant 0 : i32
    return %arg1, %arg0, %c0_i32 : i32, i32, i32
  }
}

</mosaic_0001>

<llo_original>
// kernel: input_module_forward.1
$region0: #{input_module_forward.1}
  #allocation0 [shape = 'u32[]', space=smem, size = 0x4, offset = 0x4, fixed_abs, tag = 'smem constant byte address 0x4 - core index']
  #allocation1 [shape = 'u32[144,128]{1,0:T(1,128)}', space=vmem, size = 0x12000, scoped, tag = 'internal scratch']
  #allocation2 [shape = 'f32[8,128]{1,0:T(8,128)}', space=vmem, size = 0x1000, scoped, tag = 'scratch operand']
  %s0 = inlined_call_operand.vmem [shape: bf16[16,8,384], index: 0, kind: input, shape index: {}]
  %s1 = inlined_call_operand.vmem [shape: bf16[128,384], index: 1, kind: input, shape index: {}]
  %s2 = inlined_call_operand.vmem [shape: f32[1,128], index: 2, kind: input, shape index: {}]
  %s3 = inlined_call_operand.vmem [shape: f32[4,8,128], index: 3, kind: output, shape index: {}]
  %s4 = sld [smem:[#allocation0]]
  $region49: #{input_module_forward.1} parent=0
    _
  %s6 = ssub.s32 1, %s4
  %s7 = scalar_select 0, %s6, %s4
  loop: start=0, step=1, limit=4
  $region2: #{input_module_forward.1} parent=0 // loop_pre_header
    _
  $region3: #{input_module_forward.1} parent=0 // loop_header
    %s9 = sphi 0, %s13
    %p10 = scmp.ge.s32.totalorder %s9, 4
    %s16 = sphi 0, %s28
    %s17 = sphi 0, %s24
    %s18 = sphi 0, %s16
    %s19 = sphi 0, %s17
    %s20 = sphi 0, %s18
    %s21 = sphi 0, %s19
    %s33 = sphi 0, %s35
    %s36 = sphi 0, %s33
    %s37 = sphi 0, %s36
    %s53 = sphi 0, %s37
    %s57 = sphi 0, %s57
    %s59 = sphi 0, %s57
    %s60 = sphi 0, %s59
    %s74 = sphi 0, %s60
    %s78 = sphi 0, %s78
    %s80 = sphi 0, %s78
    %s81 = sphi 0, %s80
    %s95 = sphi 0, %s81
    %s103 = sphi 0, %s105
    %s106 = sphi 0, %s103
    %s107 = sphi 0, %s106
    %s123 = sphi 0, %s107
  $region4: #{input_module_forward.1} parent=0 // loop_header_branch
    %12 = sbr.rel (%p10) target = $region8
  $region5: #{input_module_forward.1} parent=0 // loop_body
    %s14 = ssub.s32 %s9, 1
    %s15 = ssub.s32 %s9, 2
    %s22 = sadd.s32 1, %s17
    %p23 = scmp.ge.s32.totalorder %s22, 2
    %s24 = scalar_select %p23, 0, %s22
    %s25 = sadd.s32 1, %s16
    %s26 = scalar_select %p23, %s25, %s16
    %p27 = scmp.ge.s32.totalorder %s26, 1
    %s28 = scalar_select %p27, 0, %s26
    %s29 = ssub.s32 %s17, %s24
    %s30 = ssub.s32 %s16, %s28
    %s31 = sor.u32 %s29, %s30
    %p32 = scmp.eq.s32.totalorder %s31, 0
    %s34 = sadd.s32 %s33, 1
    %s35 = scalar_select %p32, %s33, %s34
    %p38 = pneg %p32
    %p39 = scmp.eq.s32.totalorder %s9, 1
    %p40 = por %p38, %p39
    %p41 = scmp.ne.s32.totalorder %s33, %s36
    %p42 = scmp.eq.s32.totalorder %s9, 0
    %p43 = por %p41, %p42
    %p44 = scmp.ne.s32.totalorder %s33, %s36
    %p45 = scmp.eq.s32.totalorder %s14, 1
    %p46 = por %p44, %p45
    %p47 = scmp.ne.s32.totalorder %s36, %s37
    %p48 = scmp.eq.s32.totalorder %s14, 0
    %p49 = por %p47, %p48
    %p50 = scmp.ne.s32.totalorder %s36, %s37
    %p51 = scmp.eq.s32.totalorder %s15, 1
    %p52 = por %p50, %p51
    %p54 = scmp.ne.s32.totalorder %s37, %s53
    %p55 = scmp.eq.s32.totalorder %s15, 0
    %p56 = por %p54, %p55
    %s58 = sadd.s32 %s57, 1
    %p61 = scmp.eq.s32.totalorder %s9, 1
    %p62 = scmp.ne.s32.totalorder %s57, %s59
    %p63 = scmp.eq.s32.totalorder %s9, 0
    %p64 = por %p62, %p63
    %p65 = scmp.ne.s32.totalorder %s57, %s59
    %p66 = scmp.eq.s32.totalorder %s14, 1
    %p67 = por %p65, %p66
    %p68 = scmp.ne.s32.totalorder %s59, %s60
    %p69 = scmp.eq.s32.totalorder %s14, 0
    %p70 = por %p68, %p69
    %p71 = scmp.ne.s32.totalorder %s59, %s60
    %p72 = scmp.eq.s32.totalorder %s15, 1
    %p73 = por %p71, %p72
    %p75 = scmp.ne.s32.totalorder %s60, %s74
    %p76 = scmp.eq.s32.totalorder %s15, 0
    %p77 = por %p75, %p76
    %s79 = sadd.s32 %s78, 1
    %p82 = scmp.eq.s32.totalorder %s9, 1
    %p83 = scmp.ne.s32.totalorder %s78, %s80
    %p84 = scmp.eq.s32.totalorder %s9, 0
    %p85 = por %p83, %p84
    %p86 = scmp.ne.s32.totalorder %s78, %s80
    %p87 = scmp.eq.s32.totalorder %s14, 1
    %p88 = por %p86, %p87
    %p89 = scmp.ne.s32.totalorder %s80, %s81
    %p90 = scmp.eq.s32.totalorder %s14, 0
    %p91 = por %p89, %p90
    %p92 = scmp.ne.s32.totalorder %s80, %s81
    %p93 = scmp.eq.s32.totalorder %s15, 1
    %p94 = por %p92, %p93
    %p96 = scmp.ne.s32.totalorder %s81, %s95
    %p97 = scmp.eq.s32.totalorder %s15, 0
    %p98 = por %p96, %p97
    %s99 = ssub.s32 %s17, %s24
    %s100 = ssub.s32 %s16, %s28
    %s101 = sor.u32 %s99, %s100
    %p102 = scmp.eq.s32.totalorder %s101, 0
    %s104 = sadd.s32 %s103, 1
    %s105 = scalar_select %p102, %s103, %s104
    %p108 = pneg %p102
    %p109 = scmp.eq.s32.totalorder %s9, 1
    %p110 = por %p108, %p109
    %p111 = scmp.ne.s32.totalorder %s103, %s106
    %p112 = scmp.eq.s32.totalorder %s9, 0
    %p113 = por %p111, %p112
    %p114 = scmp.ne.s32.totalorder %s103, %s106
    %p115 = scmp.eq.s32.totalorder %s14, 1
    %p116 = por %p114, %p115
    %p117 = scmp.ne.s32.totalorder %s106, %s107
    %p118 = scmp.eq.s32.totalorder %s14, 0
    %p119 = por %p117, %p118
    %p120 = scmp.ne.s32.totalorder %s106, %s107
    %p121 = scmp.eq.s32.totalorder %s15, 1
    %p122 = por %p120, %p121
    %p124 = scmp.ne.s32.totalorder %s107, %s123
    %p125 = scmp.eq.s32.totalorder %s15, 0
    %p126 = por %p124, %p125
    %p127 = scmp.le.s32.totalorder 1, %s9
    %p128 = scmp.lt.s32.totalorder %s9, 3
    %p129 = pnand %p127, %p128
    %p130 = pneg %p129
    // Predicated region
    $region9: #{input_module_forward.1} parent=5 // pred_check
      _
    $region10: #{input_module_forward.1} parent=5 // pred_check_branch
      %132 = sbr.rel (%p129) target = $region12
    $region11: #{input_module_forward.1} parent=5 // pred_region
      %s133 = ssub.s32 %s9, 1
      // Predicated region
      $region13: #{input_module_forward.1} parent=11 // pred_check
        %p134 = pneg %p70
      $region14: #{input_module_forward.1} parent=11 // pred_check_branch
        %136 = sbr.rel (%p134) target = $region16
      $region15: #{input_module_forward.1} parent=11 // pred_region
        _
      $region16: #{input_module_forward.1} parent=11 // pred_fallthru
        _
      // Predicated region
      $region17: #{input_module_forward.1} parent=11 // pred_check
        %p137 = pneg %p91
      $region18: #{input_module_forward.1} parent=11 // pred_check_branch
        %139 = sbr.rel (%p137) target = $region20
      $region19: #{input_module_forward.1} parent=11 // pred_region
        _
      $region20: #{input_module_forward.1} parent=11 // pred_fallthru
        _
    $region12: #{input_module_forward.1} parent=5 // pred_fallthru
      _
    %p140 = scmp.lt.s32.totalorder %s9, 2
    // Predicated region
    $region21: #{input_module_forward.1} parent=5 // pred_check
      %p141 = pneg %p140
    $region22: #{input_module_forward.1} parent=5 // pred_check_branch
      %143 = sbr.rel (%p141) target = $region24
    $region23: #{input_module_forward.1} parent=5 // pred_region
      // Predicated region
      $region25: #{input_module_forward.1} parent=23 // pred_check
        %p144 = pneg %p43
      $region26: #{input_module_forward.1} parent=23 // pred_check_branch
        %146 = sbr.rel (%p144) target = $region28
      $region27: #{input_module_forward.1} parent=23 // pred_region
        %s147 = smul.u32 8, %s17
        %p148 = scmp.lt.s32.totalorder %s147, 15
        %s149 = scalar_select %p148, %s147, 15
        %p150 = scmp.lt.s32.totalorder %s16, 0
        %s151 = scalar_select %p150, %s16, 0
        %s152 = smul.addr %s151, 3
        %s153 = smul.addr %s149, 3
        %s154 = sadd.s32 %s152, %s153
        %s155 = smul.addr %s154, 4
        %s156 = scalar_lea.vmem %s0, %s155
        %s157 = smul.u32 8, %s17
      $region28: #{input_module_forward.1} parent=23 // pred_fallthru
        _
    $region24: #{input_module_forward.1} parent=5 // pred_fallthru
      _
    %p158 = scmp.le.s32.totalorder 1, %s9
    %p159 = scmp.lt.s32.totalorder %s9, 3
    %p160 = pnand %p158, %p159
    %p161 = pneg %p160
    // Predicated region
    $region29: #{input_module_forward.1} parent=5 // pred_check
      _
    $region30: #{input_module_forward.1} parent=5 // pred_check_branch
      %163 = sbr.rel (%p160) target = $region32
    $region31: #{input_module_forward.1} parent=5 // pred_region
      %s164 = ssub.s32 %s9, 1
      %s165 = smul.u32 8, %s19
      %p166 = scmp.lt.s32.totalorder %s165, 15
      %s167 = scalar_select %p166, %s165, 15
      %p168 = scmp.lt.s32.totalorder %s18, 0
      %s169 = scalar_select %p168, %s18, 0
      %s170 = smul.addr %s169, 3
      %s171 = smul.addr %s167, 3
      %s172 = sadd.s32 %s170, %s171
      %s173 = smul.addr %s172, 4
      %s174 = scalar_lea.vmem %s0, %s173
      %p175 = pneg %p49
      %p176 = pneg %p46
      %p177 = pneg %p70
      %p178 = pneg %p67
      %p179 = pneg %p91
      %p180 = pneg %p88
      %p181 = pneg %p119
      %p182 = pneg %p116
      %s183 = smul.u32 2, %s19
      %p184 = scmp.lt.s32.totalorder %s183, 3
      %s185 = scalar_select %p184, %s183, 3
      %p186 = scmp.lt.s32.totalorder %s18, 0
      %s187 = scalar_select %p186, %s18, 0
      %s188 = sadd.s32 %s187, %s185
      %s189 = smul.addr %s188, 8
      %s190 = scalar_lea.vmem %s3, %s189
      %s191 = smul.u32 8, %s19
      %p192 = scmp.lt.s32.totalorder %s191, 15
      %s193 = scalar_select %p192, %s191, 15
      %p194 = scmp.lt.s32.totalorder %s18, 0
      %s195 = scalar_select %p194, %s18, 0
      %s196 = smul.addr %s195, 3
      %s197 = smul.addr %s193, 3
      %s198 = sadd.s32 %s196, %s197
      %s199 = smul.addr %s198, 4
      %s200 = scalar_lea.vmem %s0, %s199
      %s201 = smul.u32 8, %s19
      %s202 = smul.u32 2, %s19
      %p203 = scmp.lt.s32.totalorder %s202, 3
      %s204 = scalar_select %p203, %s202, 3
      %p205 = scmp.lt.s32.totalorder %s18, 0
      %s206 = scalar_select %p205, %s18, 0
      %s207 = sadd.s32 %s206, %s204
      %s208 = smul.addr %s207, 8
      %s209 = scalar_lea.vmem %s3, %s208
      %s210 = smul.u32 2, %s19
      %p212 = scmp.eq.s32.totalorder %s19, 0
      // Predicated region
      $region33: #{input_module_forward.1} parent=31 // pred_check
        %p213 = pneg %p212
      $region34: #{input_module_forward.1} parent=31 // pred_check_branch
        %215 = sbr.rel (%p213) target = $region36
      $region35: #{input_module_forward.1} parent=31 // pred_region
        %216 = vst [vmem:[#allocation2] sm:$0xff] 0.0
      $region36: #{input_module_forward.1} parent=31 // pred_fallthru
        _
      %v217 = vld [vmem:[%s1] sm:$0xff]
      %v218 = vld [vmem:[%s1 + $0x8] sm:$0xf]
      %v219 = vld [vmem:[%s1 + $0xc] sm:$0xff]
      %v220 = vld [vmem:[%s1 + $0x14] sm:$0xf]
      %v221 = vld [vmem:[%s1 + $0x18] sm:$0xff]
      %v222 = vld [vmem:[%s1 + $0x20] sm:$0xf]
      %v223 = vld [vmem:[%s1 + $0x24] sm:$0xff]
      %v224 = vld [vmem:[%s1 + $0x2c] sm:$0xf]
      %v225 = vld [vmem:[%s1 + $0x30] sm:$0xff]
      %v226 = vld [vmem:[%s1 + $0x38] sm:$0xf]
      %v227 = vld [vmem:[%s1 + $0x3c] sm:$0xff]
      %v228 = vld [vmem:[%s1 + $0x44] sm:$0xf]
      %v229 = vld [vmem:[%s1 + $0x48] sm:$0xff]
      %v230 = vld [vmem:[%s1 + $0x50] sm:$0xf]
      %v231 = vld [vmem:[%s1 + $0x54] sm:$0xff]
      %v232 = vld [vmem:[%s1 + $0x5c] sm:$0xf]
      %v233 = vld [vmem:[%s1 + $0x60] sm:$0xff]
      %v234 = vld [vmem:[%s1 + $0x68] sm:$0xf]
      %v235 = vld [vmem:[%s1 + $0x6c] sm:$0xff]
      %v236 = vld [vmem:[%s1 + $0x74] sm:$0xf]
      %v237 = vld [vmem:[%s1 + $0x78] sm:$0xff]
      %v238 = vld [vmem:[%s1 + $0x80] sm:$0xf]
      %v239 = vld [vmem:[%s1 + $0x84] sm:$0xff]
      %v240 = vld [vmem:[%s1 + $0x8c] sm:$0xf]
      %v241 = vld [vmem:[%s1 + $0x90] sm:$0xff]
      %v242 = vld [vmem:[%s1 + $0x98] sm:$0xf]
      %v243 = vld [vmem:[%s1 + $0x9c] sm:$0xff]
      %v244 = vld [vmem:[%s1 + $0xa4] sm:$0xf]
      %v245 = vld [vmem:[%s1 + $0xa8] sm:$0xff]
      %v246 = vld [vmem:[%s1 + $0xb0] sm:$0xf]
      %v247 = vld [vmem:[%s1 + $0xb4] sm:$0xff]
      %v248 = vld [vmem:[%s1 + $0xbc] sm:$0xf]
      %v249 = vld [vmem:[%s2] sm:$0x1]
      %v251 = vlaneseq
      %v252 = vshrl.u32 %v251, 7
      %v253 = vsub.s32 0, %v252
      %v254 = vrot.slane %v249, %v253
      %v256 = vld [vmem:[#allocation2] sm:$0xff]
      %v257 = vld [vmem:[%s200] sm:$0xff]
      %v258 = vld [vmem:[%s200 + $0x8] sm:$0xf]
      %v259 = vunpack.c.l.bf16 %v257
      %v260 = vunpack.c.h.bf16 %v257
      %v261 = vunpack.c.l.bf16 %v258
      %v262 = vpack.c.bf16 %v256, %v256
      %v295 = vunpack.c.l.b16 %v217
      %v296 = vunpack.c.h.b16 %v217
      %v297 = vunpack.c.l.b16 %v218
      %v298 = vunpack.c.l.b16 %v219
      %v299 = vunpack.c.h.b16 %v219
      %v300 = vunpack.c.l.b16 %v220
      %v301 = vunpack.c.l.b16 %v221
      %v302 = vunpack.c.h.b16 %v221
      %v303 = vunpack.c.l.b16 %v222
      %v304 = vunpack.c.l.b16 %v223
      %v305 = vunpack.c.h.b16 %v223
      %v306 = vunpack.c.l.b16 %v224
      %v307 = vunpack.c.l.b16 %v225
      %v308 = vunpack.c.h.b16 %v225
      %v309 = vunpack.c.l.b16 %v226
      %v310 = vunpack.c.l.b16 %v227
      %v311 = vunpack.c.h.b16 %v227
      %v312 = vunpack.c.l.b16 %v228
      %v313 = vunpack.c.l.b16 %v229
      %v314 = vunpack.c.h.b16 %v229
      %v315 = vunpack.c.l.b16 %v230
      %v316 = vunpack.c.l.b16 %v231
      %v317 = vunpack.c.h.b16 %v231
      %v318 = vunpack.c.l.b16 %v232
      %v319 = vunpack.c.l.b16 %v233
      %v320 = vunpack.c.h.b16 %v233
      %v321 = vunpack.c.l.b16 %v234
      %v322 = vunpack.c.l.b16 %v235
      %v323 = vunpack.c.h.b16 %v235
      %v324 = vunpack.c.l.b16 %v236
      %v325 = vunpack.c.l.b16 %v237
      %v326 = vunpack.c.h.b16 %v237
      %v327 = vunpack.c.l.b16 %v238
      %v328 = vunpack.c.l.b16 %v239
      %v329 = vunpack.c.h.b16 %v239
      %v330 = vunpack.c.l.b16 %v240
      %v331 = vunpack.c.l.b16 %v241
      %v332 = vunpack.c.h.b16 %v241
      %v333 = vunpack.c.l.b16 %v242
      %v334 = vunpack.c.l.b16 %v243
      %v335 = vunpack.c.h.b16 %v243
      %v336 = vunpack.c.l.b16 %v244
      %v337 = vunpack.c.l.b16 %v245
      %v338 = vunpack.c.h.b16 %v245
      %v339 = vunpack.c.l.b16 %v246
      %v340 = vunpack.c.l.b16 %v247
      %v341 = vunpack.c.h.b16 %v247
      %v342 = vunpack.c.l.b16 %v248
      %v343 = vpack.c.b16 %v298, %v295
      %v344 = vpack.c.b16 %v299, %v296
      %v345 = vpack.c.b16 %v300, %v297
      %v346 = vpack.c.b16 %v304, %v301
      %v347 = vpack.c.b16 %v305, %v302
      %v348 = vpack.c.b16 %v306, %v303
      %v349 = vpack.c.b16 %v310, %v307
      %v350 = vpack.c.b16 %v311, %v308
      %v351 = vpack.c.b16 %v312, %v309
      %v352 = vpack.c.b16 %v316, %v313
      %v353 = vpack.c.b16 %v317, %v314
      %v354 = vpack.c.b16 %v318, %v315
      %v355 = vpack.c.b16 %v322, %v319
      %v356 = vpack.c.b16 %v323, %v320
      %v357 = vpack.c.b16 %v324, %v321
      %v358 = vpack.c.b16 %v328, %v325
      %v359 = vpack.c.b16 %v329, %v326
      %v360 = vpack.c.b16 %v330, %v327
      %v361 = vpack.c.b16 %v334, %v331
      %v362 = vpack.c.b16 %v335, %v332
      %v363 = vpack.c.b16 %v336, %v333
      %v364 = vpack.c.b16 %v340, %v337
      %v365 = vpack.c.b16 %v341, %v338
      %v366 = vpack.c.b16 %v342, %v339
      %391 = vmatprep.subr.bf16.mxu0 %v344
      %392 = vmatpush1.bf16.msra.mxu0 %v343
      %393 = vmatprep.subr.bf16.mxu0 %v347
      %394 = vmatpush1.bf16.msra.mxu0 %v346
      %395 = vmatprep.subr.bf16.mxu0 %v350
      %396 = vmatpush1.bf16.msra.mxu0 %v349
      %397 = vmatprep.subr.bf16.mxu0 %v353
      %398 = vmatpush1.bf16.msra.mxu0 %v352
      %399 = vmatprep.subr.bf16.mxu0 %v356
      %400 = vmatpush1.bf16.msra.mxu0 %v355
      %401 = vmatprep.subr.bf16.mxu0 %v359
      %402 = vmatpush1.bf16.msra.mxu0 %v358
      %403 = vmatprep.subr.bf16.mxu0 %v362
      %404 = vmatpush1.bf16.msra.mxu0 %v361
      %405 = vmatprep.subr.bf16.mxu0 %v365
      %406 = vmatpush1.bf16.msra.mxu0 %v364
      %407 = vmatprep.subr.bf16.mxu0 0
      %408 = vmatpush1.bf16.msra.mxu0 0
      %409 = vmatprep.subr.bf16.mxu0 0
      %410 = vmatpush1.bf16.msra.mxu0 0
      %411 = vmatprep.subr.bf16.mxu0 0
      %412 = vmatpush1.bf16.msra.mxu0 0
      %413 = vmatprep.subr.bf16.mxu0 0
      %414 = vmatpush1.bf16.msra.mxu0 0
      %415 = vmatprep.subr.bf16.mxu0 0
      %416 = vmatpush1.bf16.msra.mxu0 0
      %417 = vmatprep.subr.bf16.mxu0 0
      %418 = vmatpush1.bf16.msra.mxu0 0
      %419 = vmatprep.subr.bf16.mxu0 0
      %420 = vmatpush1.bf16.msra.mxu0 0
      %421 = vmatprep.subr.bf16.mxu0 0
      %422 = vmatpush1.bf16.msra.mxu0 0
      %423 = vmatprep.mubr.bf16.mxu0 0
      %424 = vmatmul.mubr.bf16.gmra.mrb[0].mxu0 %v262
      %v425 = vpop.f32.mrb[0].mxu0
      %v426 = vadd.f32 0.0, %v425
      %v427 = vpop.f32.mrb[0].mxu0
      %v428 = vadd.f32 0.0, %v427
      %v429 = vpop.f32.mrb[0].mxu0
      %v430 = vpop.f32.mrb[0].mxu0
      %431 = vdwg.mxu0
      %432 = vmatprep.subr.bf16.mxu0 0
      %433 = vmatpush1.bf16.msra.mxu0 %v345
      %434 = vmatprep.subr.bf16.mxu0 0
      %435 = vmatpush1.bf16.msra.mxu0 %v348
      %436 = vmatprep.subr.bf16.mxu0 0
      %437 = vmatpush1.bf16.msra.mxu0 %v351
      %438 = vmatprep.subr.bf16.mxu0 0
      %439 = vmatpush1.bf16.msra.mxu0 %v354
      %440 = vmatprep.subr.bf16.mxu0 0
      %441 = vmatpush1.bf16.msra.mxu0 %v357
      %442 = vmatprep.subr.bf16.mxu0 0
      %443 = vmatpush1.bf16.msra.mxu0 %v360
      %444 = vmatprep.subr.bf16.mxu0 0
      %445 = vmatpush1.bf16.msra.mxu0 %v363
      %446 = vmatprep.subr.bf16.mxu0 0
      %447 = vmatpush1.bf16.msra.mxu0 %v366
      %448 = vmatprep.subr.bf16.mxu0 0
      %449 = vmatpush1.bf16.msra.mxu0 0
      %450 = vmatprep.subr.bf16.mxu0 0
      %451 = vmatpush1.bf16.msra.mxu0 0
      %452 = vmatprep.subr.bf16.mxu0 0
      %453 = vmatpush1.bf16.msra.mxu0 0
      %454 = vmatprep.subr.bf16.mxu0 0
      %455 = vmatpush1.bf16.msra.mxu0 0
      %456 = vmatprep.subr.bf16.mxu0 0
      %457 = vmatpush1.bf16.msra.mxu0 0
      %458 = vmatprep.subr.bf16.mxu0 0
      %459 = vmatpush1.bf16.msra.mxu0 0
      %460 = vmatprep.subr.bf16.mxu0 0
      %461 = vmatpush1.bf16.msra.mxu0 0
      %462 = vmatprep.subr.bf16.mxu0 0
      %463 = vmatpush1.bf16.msra.mxu0 0
      %464 = vmatprep.mubr.bf16.mxu0 0
      %465 = vmatmul.mubr.bf16.gmra.mrb[0].mxu0 %v262
      %v466 = vpop.f32.mrb[0].mxu0
      %v467 = vadd.f32 0.0, %v466
      %v468 = vpop.f32.mrb[0].mxu0
      %v469 = vpop.f32.mrb[0].mxu0
      %v470 = vpop.f32.mrb[0].mxu0
      %471 = vdwg.mxu0
      %v472 = vadd.f32 %v259, %v426
      %v473 = vxor.u32 %v472, 2147483648
      %v474 = vmul.f32 %v473, 1.442695
      %v475 = vpow.pop %v474
      %v476 = vadd.f32 %v475, 1.0
      %v477 = vrcp.pop %v476
      %v478 = vmul.f32 1.0, %v477
      %v479 = vadd.f32 %v260, %v428
      %v480 = vxor.u32 %v479, 2147483648
      %v481 = vmul.f32 %v480, 1.442695
      %v482 = vpow.pop %v481
      %v483 = vadd.f32 %v482, 1.0
      %v484 = vrcp.pop %v483
      %v485 = vmul.f32 1.0, %v484
      %v486 = vadd.f32 %v467, %v254
      %v487 = vmul.f32 %v478, %v486
      %v488 = vadd.f32 %v261, %v487
      %v489 = vtanh.pop %v488
      %v490 = vsub.f32 %v256, %v489
      %v491 = vmul.f32 %v485, %v490
      %v492 = vadd.f32 %v489, %v491
      %s493 = scalar_lea.vmem %s200, 12
      %v494 = vld [vmem:[%s493] sm:$0xff]
      %v495 = vld [vmem:[%s493 + $0x8] sm:$0xf]
      %v496 = vunpack.c.l.bf16 %v494
      %v497 = vunpack.c.h.bf16 %v494
      %v498 = vunpack.c.l.bf16 %v495
      %v499 = vpack.c.bf16 %v492, %v492
      %500 = vmatprep.subr.bf16.mxu0 %v344
      %501 = vmatpush1.bf16.msra.mxu0 %v343
      %502 = vmatprep.subr.bf16.mxu0 %v347
      %503 = vmatpush1.bf16.msra.mxu0 %v346
      %504 = vmatprep.subr.bf16.mxu0 %v350
      %505 = vmatpush1.bf16.msra.mxu0 %v349
      %506 = vmatprep.subr.bf16.mxu0 %v353
      %507 = vmatpush1.bf16.msra.mxu0 %v352
      %508 = vmatprep.subr.bf16.mxu0 %v356
      %509 = vmatpush1.bf16.msra.mxu0 %v355
      %510 = vmatprep.subr.bf16.mxu0 %v359
      %511 = vmatpush1.bf16.msra.mxu0 %v358
      %512 = vmatprep.subr.bf16.mxu0 %v362
      %513 = vmatpush1.bf16.msra.mxu0 %v361
      %514 = vmatprep.subr.bf16.mxu0 %v365
      %515 = vmatpush1.bf16.msra.mxu0 %v364
      %516 = vmatprep.subr.bf16.mxu0 0
      %517 = vmatpush1.bf16.msra.mxu0 0
      %518 = vmatprep.subr.bf16.mxu0 0
      %519 = vmatpush1.bf16.msra.mxu0 0
      %520 = vmatprep.subr.bf16.mxu0 0
      %521 = vmatpush1.bf16.msra.mxu0 0
      %522 = vmatprep.subr.bf16.mxu0 0
      %523 = vmatpush1.bf16.msra.mxu0 0
      %524 = vmatprep.subr.bf16.mxu0 0
      %525 = vmatpush1.bf16.msra.mxu0 0
      %526 = vmatprep.subr.bf16.mxu0 0
      %527 = vmatpush1.bf16.msra.mxu0 0
      %528 = vmatprep.subr.bf16.mxu0 0
      %529 = vmatpush1.bf16.msra.mxu0 0
      %530 = vmatprep.subr.bf16.mxu0 0
      %531 = vmatpush1.bf16.msra.mxu0 0
      %532 = vmatprep.mubr.bf16.mxu0 0
      %533 = vmatmul.mubr.bf16.gmra.mrb[0].mxu0 %v499
      %v534 = vpop.f32.mrb[0].mxu0
      %v535 = vadd.f32 0.0, %v534
      %v536 = vpop.f32.mrb[0].mxu0
      %v537 = vadd.f32 0.0, %v536
      %v538 = vpop.f32.mrb[0].mxu0
      %v539 = vpop.f32.mrb[0].mxu0
      %540 = vdwg.mxu0
      %541 = vmatprep.subr.bf16.mxu0 0
      %542 = vmatpush1.bf16.msra.mxu0 %v345
      %543 = vmatprep.subr.bf16.mxu0 0
      %544 = vmatpush1.bf16.msra.mxu0 %v348
      %545 = vmatprep.subr.bf16.mxu0 0
      %546 = vmatpush1.bf16.msra.mxu0 %v351
      %547 = vmatprep.subr.bf16.mxu0 0
      %548 = vmatpush1.bf16.msra.mxu0 %v354
      %549 = vmatprep.subr.bf16.mxu0 0
      %550 = vmatpush1.bf16.msra.mxu0 %v357
      %551 = vmatprep.subr.bf16.mxu0 0
      %552 = vmatpush1.bf16.msra.mxu0 %v360
      %553 = vmatprep.subr.bf16.mxu0 0
      %554 = vmatpush1.bf16.msra.mxu0 %v363
      %555 = vmatprep.subr.bf16.mxu0 0
      %556 = vmatpush1.bf16.msra.mxu0 %v366
      %557 = vmatprep.subr.bf16.mxu0 0
      %558 = vmatpush1.bf16.msra.mxu0 0
      %559 = vmatprep.subr.bf16.mxu0 0
      %560 = vmatpush1.bf16.msra.mxu0 0
      %561 = vmatprep.subr.bf16.mxu0 0
      %562 = vmatpush1.bf16.msra.mxu0 0
      %563 = vmatprep.subr.bf16.mxu0 0
      %564 = vmatpush1.bf16.msra.mxu0 0
      %565 = vmatprep.subr.bf16.mxu0 0
      %566 = vmatpush1.bf16.msra.mxu0 0
      %567 = vmatprep.subr.bf16.mxu0 0
      %568 = vmatpush1.bf16.msra.mxu0 0
      %569 = vmatprep.subr.bf16.mxu0 0
      %570 = vmatpush1.bf16.msra.mxu0 0
      %571 = vmatprep.subr.bf16.mxu0 0
      %572 = vmatpush1.bf16.msra.mxu0 0
      %573 = vmatprep.mubr.bf16.mxu0 0
      %574 = vmatmul.mubr.bf16.gmra.mrb[0].mxu0 %v499
      %v575 = vpop.f32.mrb[0].mxu0
      %v576 = vadd.f32 0.0, %v575
      %v577 = vpop.f32.mrb[0].mxu0
      %v578 = vpop.f32.mrb[0].mxu0
      %v579 = vpop.f32.mrb[0].mxu0
      %580 = vdwg.mxu0
      %v581 = vadd.f32 %v496, %v535
      %v582 = vxor.u32 %v581, 2147483648
      %v583 = vmul.f32 %v582, 1.442695
      %v584 = vpow.pop %v583
      %v585 = vadd.f32 %v584, 1.0
      %v586 = vrcp.pop %v585
      %v587 = vmul.f32 1.0, %v586
      %v588 = vadd.f32 %v497, %v537
      %v589 = vxor.u32 %v588, 2147483648
      %v590 = vmul.f32 %v589, 1.442695
      %v591 = vpow.pop %v590
      %v592 = vadd.f32 %v591, 1.0
      %v593 = vrcp.pop %v592
      %v594 = vmul.f32 1.0, %v593
      %v595 = vadd.f32 %v576, %v254
      %v596 = vmul.f32 %v587, %v595
      %v597 = vadd.f32 %v498, %v596
      %v598 = vtanh.pop %v597
      %v599 = vsub.f32 %v492, %v598
      %v600 = vmul.f32 %v594, %v599
      %v601 = vadd.f32 %v598, %v600
      %s602 = scalar_lea.vmem %s200, 24
      %v603 = vld [vmem:[%s602] sm:$0xff]
      %v604 = vld [vmem:[%s602 + $0x8] sm:$0xf]
      %v605 = vunpack.c.l.bf16 %v603
      %v606 = vunpack.c.h.bf16 %v603
      %v607 = vunpack.c.l.bf16 %v604
      %v608 = vpack.c.bf16 %v601, %v601
      %609 = vmatprep.subr.bf16.mxu0 %v344
      %610 = vmatpush1.bf16.msra.mxu0 %v343
      %611 = vmatprep.subr.bf16.mxu0 %v347
      %612 = vmatpush1.bf16.msra.mxu0 %v346
      %613 = vmatprep.subr.bf16.mxu0 %v350
      %614 = vmatpush1.bf16.msra.mxu0 %v349
      %615 = vmatprep.subr.bf16.mxu0 %v353
      %616 = vmatpush1.bf16.msra.mxu0 %v352
      %617 = vmatprep.subr.bf16.mxu0 %v356
      %618 = vmatpush1.bf16.msra.mxu0 %v355
      %619 = vmatprep.subr.bf16.mxu0 %v359
      %620 = vmatpush1.bf16.msra.mxu0 %v358
      %621 = vmatprep.subr.bf16.mxu0 %v362
      %622 = vmatpush1.bf16.msra.mxu0 %v361
      %623 = vmatprep.subr.bf16.mxu0 %v365
      %624 = vmatpush1.bf16.msra.mxu0 %v364
      %625 = vmatprep.subr.bf16.mxu0 0
      %626 = vmatpush1.bf16.msra.mxu0 0
      %627 = vmatprep.subr.bf16.mxu0 0
      %628 = vmatpush1.bf16.msra.mxu0 0
      %629 = vmatprep.subr.bf16.mxu0 0
      %630 = vmatpush1.bf16.msra.mxu0 0
      %631 = vmatprep.subr.bf16.mxu0 0
      %632 = vmatpush1.bf16.msra.mxu0 0
      %633 = vmatprep.subr.bf16.mxu0 0
      %634 = vmatpush1.bf16.msra.mxu0 0
      %635 = vmatprep.subr.bf16.mxu0 0
      %636 = vmatpush1.bf16.msra.mxu0 0
      %637 = vmatprep.subr.bf16.mxu0 0
      %638 = vmatpush1.bf16.msra.mxu0 0
      %639 = vmatprep.subr.bf16.mxu0 0
      %640 = vmatpush1.bf16.msra.mxu0 0
      %641 = vmatprep.mubr.bf16.mxu0 0
      %642 = vmatmul.mubr.bf16.gmra.mrb[0].mxu0 %v608
      %v643 = vpop.f32.mrb[0].mxu0
      %v644 = vadd.f32 0.0, %v643
      %v645 = vpop.f32.mrb[0].mxu0
      %v646 = vadd.f32 0.0, %v645
      %v647 = vpop.f32.mrb[0].mxu0
      %v648 = vpop.f32.mrb[0].mxu0
      %649 = vdwg.mxu0
      %650 = vmatprep.subr.bf16.mxu0 0
      %651 = vmatpush1.bf16.msra.mxu0 %v345
      %652 = vmatprep.subr.bf16.mxu0 0
      %653 = vmatpush1.bf16.msra.mxu0 %v348
      %654 = vmatprep.subr.bf16.mxu0 0
      %655 = vmatpush1.bf16.msra.mxu0 %v351
      %656 = vmatprep.subr.bf16.mxu0 0
      %657 = vmatpush1.bf16.msra.mxu0 %v354
      %658 = vmatprep.subr.bf16.mxu0 0
      %659 = vmatpush1.bf16.msra.mxu0 %v357
      %660 = vmatprep.subr.bf16.mxu0 0
      %661 = vmatpush1.bf16.msra.mxu0 %v360
      %662 = vmatprep.subr.bf16.mxu0 0
      %663 = vmatpush1.bf16.msra.mxu0 %v363
      %664 = vmatprep.subr.bf16.mxu0 0
      %665 = vmatpush1.bf16.msra.mxu0 %v366
      %666 = vmatprep.subr.bf16.mxu0 0
      %667 = vmatpush1.bf16.msra.mxu0 0
      %668 = vmatprep.subr.bf16.mxu0 0
      %669 = vmatpush1.bf16.msra.mxu0 0
      %670 = vmatprep.subr.bf16.mxu0 0
      %671 = vmatpush1.bf16.msra.mxu0 0
      %672 = vmatprep.subr.bf16.mxu0 0
      %673 = vmatpush1.bf16.msra.mxu0 0
      %674 = vmatprep.subr.bf16.mxu0 0
      %675 = vmatpush1.bf16.msra.mxu0 0
      %676 = vmatprep.subr.bf16.mxu0 0
      %677 = vmatpush1.bf16.msra.mxu0 0
      %678 = vmatprep.subr.bf16.mxu0 0
      %679 = vmatpush1.bf16.msra.mxu0 0
      %680 = vmatprep.subr.bf16.mxu0 0
      %681 = vmatpush1.bf16.msra.mxu0 0
      %682 = vmatprep.mubr.bf16.mxu0 0
      %683 = vmatmul.mubr.bf16.gmra.mrb[0].mxu0 %v608
      %v684 = vpop.f32.mrb[0].mxu0
      %v685 = vadd.f32 0.0, %v684
      %v686 = vpop.f32.mrb[0].mxu0
      %v687 = vpop.f32.mrb[0].mxu0
      %v688 = vpop.f32.mrb[0].mxu0
      %689 = vdwg.mxu0
      %v690 = vadd.f32 %v605, %v644
      %v691 = vxor.u32 %v690, 2147483648
      %v692 = vmul.f32 %v691, 1.442695
      %v693 = vpow.pop %v692
      %v694 = vadd.f32 %v693, 1.0
      %v695 = vrcp.pop %v694
      %v696 = vmul.f32 1.0, %v695
      %v697 = vadd.f32 %v606, %v646
      %v698 = vxor.u32 %v697, 2147483648
      %v699 = vmul.f32 %v698, 1.442695
      %v700 = vpow.pop %v699
      %v701 = vadd.f32 %v700, 1.0
      %v702 = vrcp.pop %v701
      %v703 = vmul.f32 1.0, %v702
      %v704 = vadd.f32 %v685, %v254
      %v705 = vmul.f32 %v696, %v704
      %v706 = vadd.f32 %v607, %v705
      %v707 = vtanh.pop %v706
      %v708 = vsub.f32 %v601, %v707
      %v709 = vmul.f32 %v703, %v708
      %v710 = vadd.f32 %v707, %v709
      %s711 = scalar_lea.vmem %s200, 36
      %v712 = vld [vmem:[%s711] sm:$0xff]
      %v713 = vld [vmem:[%s711 + $0x8] sm:$0xf]
      %v714 = vunpack.c.l.bf16 %v712
      %v715 = vunpack.c.h.bf16 %v712
      %v716 = vunpack.c.l.bf16 %v713
      %v717 = vpack.c.bf16 %v710, %v710
      %718 = vmatprep.subr.bf16.mxu0 %v344
      %719 = vmatpush1.bf16.msra.mxu0 %v343
      %720 = vmatprep.subr.bf16.mxu0 %v347
      %721 = vmatpush1.bf16.msra.mxu0 %v346
      %722 = vmatprep.subr.bf16.mxu0 %v350
      %723 = vmatpush1.bf16.msra.mxu0 %v349
      %724 = vmatprep.subr.bf16.mxu0 %v353
      %725 = vmatpush1.bf16.msra.mxu0 %v352
      %726 = vmatprep.subr.bf16.mxu0 %v356
      %727 = vmatpush1.bf16.msra.mxu0 %v355
      %728 = vmatprep.subr.bf16.mxu0 %v359
      %729 = vmatpush1.bf16.msra.mxu0 %v358
      %730 = vmatprep.subr.bf16.mxu0 %v362
      %731 = vmatpush1.bf16.msra.mxu0 %v361
      %732 = vmatprep.subr.bf16.mxu0 %v365
      %733 = vmatpush1.bf16.msra.mxu0 %v364
      %734 = vmatprep.subr.bf16.mxu0 0
      %735 = vmatpush1.bf16.msra.mxu0 0
      %736 = vmatprep.subr.bf16.mxu0 0
      %737 = vmatpush1.bf16.msra.mxu0 0
      %738 = vmatprep.subr.bf16.mxu0 0
      %739 = vmatpush1.bf16.msra.mxu0 0
      %740 = vmatprep.subr.bf16.mxu0 0
      %741 = vmatpush1.bf16.msra.mxu0 0
      %742 = vmatprep.subr.bf16.mxu0 0
      %743 = vmatpush1.bf16.msra.mxu0 0
      %744 = vmatprep.subr.bf16.mxu0 0
      %745 = vmatpush1.bf16.msra.mxu0 0
      %746 = vmatprep.subr.bf16.mxu0 0
      %747 = vmatpush1.bf16.msra.mxu0 0
      %748 = vmatprep.subr.bf16.mxu0 0
      %749 = vmatpush1.bf16.msra.mxu0 0
      %750 = vmatprep.mubr.bf16.mxu0 0
      %751 = vmatmul.mubr.bf16.gmra.mrb[0].mxu0 %v717
      %v752 = vpop.f32.mrb[0].mxu0
      %v753 = vadd.f32 0.0, %v752
      %v754 = vpop.f32.mrb[0].mxu0
      %v755 = vadd.f32 0.0, %v754
      %v756 = vpop.f32.mrb[0].mxu0
      %v757 = vpop.f32.mrb[0].mxu0
      %758 = vdwg.mxu0
      %759 = vmatprep.subr.bf16.mxu0 0
      %760 = vmatpush1.bf16.msra.mxu0 %v345
      %761 = vmatprep.subr.bf16.mxu0 0
      %762 = vmatpush1.bf16.msra.mxu0 %v348
      %763 = vmatprep.subr.bf16.mxu0 0
      %764 = vmatpush1.bf16.msra.mxu0 %v351
      %765 = vmatprep.subr.bf16.mxu0 0
      %766 = vmatpush1.bf16.msra.mxu0 %v354
      %767 = vmatprep.subr.bf16.mxu0 0
      %768 = vmatpush1.bf16.msra.mxu0 %v357
      %769 = vmatprep.subr.bf16.mxu0 0
      %770 = vmatpush1.bf16.msra.mxu0 %v360
      %771 = vmatprep.subr.bf16.mxu0 0
      %772 = vmatpush1.bf16.msra.mxu0 %v363
      %773 = vmatprep.subr.bf16.mxu0 0
      %774 = vmatpush1.bf16.msra.mxu0 %v366
      %775 = vmatprep.subr.bf16.mxu0 0
      %776 = vmatpush1.bf16.msra.mxu0 0
      %777 = vmatprep.subr.bf16.mxu0 0
      %778 = vmatpush1.bf16.msra.mxu0 0
      %779 = vmatprep.subr.bf16.mxu0 0
      %780 = vmatpush1.bf16.msra.mxu0 0
      %781 = vmatprep.subr.bf16.mxu0 0
      %782 = vmatpush1.bf16.msra.mxu0 0
      %783 = vmatprep.subr.bf16.mxu0 0
      %784 = vmatpush1.bf16.msra.mxu0 0
      %785 = vmatprep.subr.bf16.mxu0 0
      %786 = vmatpush1.bf16.msra.mxu0 0
      %787 = vmatprep.subr.bf16.mxu0 0
      %788 = vmatpush1.bf16.msra.mxu0 0
      %789 = vmatprep.subr.bf16.mxu0 0
      %790 = vmatpush1.bf16.msra.mxu0 0
      %791 = vmatprep.mubr.bf16.mxu0 0
      %792 = vmatmul.mubr.bf16.gmra.mrb[0].mxu0 %v717
      %v793 = vpop.f32.mrb[0].mxu0
      %v794 = vadd.f32 0.0, %v793
      %v795 = vpop.f32.mrb[0].mxu0
      %v796 = vpop.f32.mrb[0].mxu0
      %v797 = vpop.f32.mrb[0].mxu0
      %798 = vdwg.mxu0
      %v799 = vadd.f32 %v714, %v753
      %v800 = vxor.u32 %v799, 2147483648
      %v801 = vmul.f32 %v800, 1.442695
      %v802 = vpow.pop %v801
      %v803 = vadd.f32 %v802, 1.0
      %v804 = vrcp.pop %v803
      %v805 = vmul.f32 1.0, %v804
      %v806 = vadd.f32 %v715, %v755
      %v807 = vxor.u32 %v806, 2147483648
      %v808 = vmul.f32 %v807, 1.442695
      %v809 = vpow.pop %v808
      %v810 = vadd.f32 %v809, 1.0
      %v811 = vrcp.pop %v810
      %v812 = vmul.f32 1.0, %v811
      %v813 = vadd.f32 %v794, %v254
      %v814 = vmul.f32 %v805, %v813
      %v815 = vadd.f32 %v716, %v814
      %v816 = vtanh.pop %v815
      %v817 = vsub.f32 %v710, %v816
      %v818 = vmul.f32 %v812, %v817
      %v819 = vadd.f32 %v816, %v818
      %820 = vst [vmem:[%s209] sm:$0xff] %v819
      %s821 = scalar_lea.vmem %s200, 48
      %v822 = vld [vmem:[%s821] sm:$0xff]
      %v823 = vld [vmem:[%s821 + $0x8] sm:$0xf]
      %v824 = vunpack.c.l.bf16 %v822
      %v825 = vunpack.c.h.bf16 %v822
      %v826 = vunpack.c.l.bf16 %v823
      %v827 = vpack.c.bf16 %v819, %v819
      %828 = vmatprep.subr.bf16.mxu0 %v344
      %829 = vmatpush1.bf16.msra.mxu0 %v343
      %830 = vmatprep.subr.bf16.mxu0 %v347
      %831 = vmatpush1.bf16.msra.mxu0 %v346
      %832 = vmatprep.subr.bf16.mxu0 %v350
      %833 = vmatpush1.bf16.msra.mxu0 %v349
      %834 = vmatprep.subr.bf16.mxu0 %v353
      %835 = vmatpush1.bf16.msra.mxu0 %v352
      %836 = vmatprep.subr.bf16.mxu0 %v356
      %837 = vmatpush1.bf16.msra.mxu0 %v355
      %838 = vmatprep.subr.bf16.mxu0 %v359
      %839 = vmatpush1.bf16.msra.mxu0 %v358
      %840 = vmatprep.subr.bf16.mxu0 %v362
      %841 = vmatpush1.bf16.msra.mxu0 %v361
      %842 = vmatprep.subr.bf16.mxu0 %v365
      %843 = vmatpush1.bf16.msra.mxu0 %v364
      %844 = vmatprep.subr.bf16.mxu0 0
      %845 = vmatpush1.bf16.msra.mxu0 0
      %846 = vmatprep.subr.bf16.mxu0 0
      %847 = vmatpush1.bf16.msra.mxu0 0
      %848 = vmatprep.subr.bf16.mxu0 0
      %849 = vmatpush1.bf16.msra.mxu0 0
      %850 = vmatprep.subr.bf16.mxu0 0
      %851 = vmatpush1.bf16.msra.mxu0 0
      %852 = vmatprep.subr.bf16.mxu0 0
      %853 = vmatpush1.bf16.msra.mxu0 0
      %854 = vmatprep.subr.bf16.mxu0 0
      %855 = vmatpush1.bf16.msra.mxu0 0
      %856 = vmatprep.subr.bf16.mxu0 0
      %857 = vmatpush1.bf16.msra.mxu0 0
      %858 = vmatprep.subr.bf16.mxu0 0
      %859 = vmatpush1.bf16.msra.mxu0 0
      %860 = vmatprep.mubr.bf16.mxu0 0
      %861 = vmatmul.mubr.bf16.gmra.mrb[0].mxu0 %v827
      %v862 = vpop.f32.mrb[0].mxu0
      %v863 = vadd.f32 0.0, %v862
      %v864 = vpop.f32.mrb[0].mxu0
      %v865 = vadd.f32 0.0, %v864
      %v866 = vpop.f32.mrb[0].mxu0
      %v867 = vpop.f32.mrb[0].mxu0
      %868 = vdwg.mxu0
      %869 = vmatprep.subr.bf16.mxu0 0
      %870 = vmatpush1.bf16.msra.mxu0 %v345
      %871 = vmatprep.subr.bf16.mxu0 0
      %872 = vmatpush1.bf16.msra.mxu0 %v348
      %873 = vmatprep.subr.bf16.mxu0 0
      %874 = vmatpush1.bf16.msra.mxu0 %v351
      %875 = vmatprep.subr.bf16.mxu0 0
      %876 = vmatpush1.bf16.msra.mxu0 %v354
      %877 = vmatprep.subr.bf16.mxu0 0
      %878 = vmatpush1.bf16.msra.mxu0 %v357
      %879 = vmatprep.subr.bf16.mxu0 0
      %880 = vmatpush1.bf16.msra.mxu0 %v360
      %881 = vmatprep.subr.bf16.mxu0 0
      %882 = vmatpush1.bf16.msra.mxu0 %v363
      %883 = vmatprep.subr.bf16.mxu0 0
      %884 = vmatpush1.bf16.msra.mxu0 %v366
      %885 = vmatprep.subr.bf16.mxu0 0
      %886 = vmatpush1.bf16.msra.mxu0 0
      %887 = vmatprep.subr.bf16.mxu0 0
      %888 = vmatpush1.bf16.msra.mxu0 0
      %889 = vmatprep.subr.bf16.mxu0 0
      %890 = vmatpush1.bf16.msra.mxu0 0
      %891 = vmatprep.subr.bf16.mxu0 0
      %892 = vmatpush1.bf16.msra.mxu0 0
      %893 = vmatprep.subr.bf16.mxu0 0
      %894 = vmatpush1.bf16.msra.mxu0 0
      %895 = vmatprep.subr.bf16.mxu0 0
      %896 = vmatpush1.bf16.msra.mxu0 0
      %897 = vmatprep.subr.bf16.mxu0 0
      %898 = vmatpush1.bf16.msra.mxu0 0
      %899 = vmatprep.subr.bf16.mxu0 0
      %900 = vmatpush1.bf16.msra.mxu0 0
      %901 = vmatprep.mubr.bf16.mxu0 0
      %902 = vmatmul.mubr.bf16.gmra.mrb[0].mxu0 %v827
      %v903 = vpop.f32.mrb[0].mxu0
      %v904 = vadd.f32 0.0, %v903
      %v905 = vpop.f32.mrb[0].mxu0
      %v906 = vpop.f32.mrb[0].mxu0
      %v907 = vpop.f32.mrb[0].mxu0
      %908 = vdwg.mxu0
      %v909 = vadd.f32 %v824, %v863
      %v910 = vxor.u32 %v909, 2147483648
      %v911 = vmul.f32 %v910, 1.442695
      %v912 = vpow.pop %v911
      %v913 = vadd.f32 %v912, 1.0
      %v914 = vrcp.pop %v913
      %v915 = vmul.f32 1.0, %v914
      %v916 = vadd.f32 %v825, %v865
      %v917 = vxor.u32 %v916, 2147483648
      %v918 = vmul.f32 %v917, 1.442695
      %v919 = vpow.pop %v918
      %v920 = vadd.f32 %v919, 1.0
      %v921 = vrcp.pop %v920
      %v922 = vmul.f32 1.0, %v921
      %v923 = vadd.f32 %v904, %v254
      %v924 = vmul.f32 %v915, %v923
      %v925 = vadd.f32 %v826, %v924
      %v926 = vtanh.pop %v925
      %v927 = vsub.f32 %v819, %v926
      %v928 = vmul.f32 %v922, %v927
      %v929 = vadd.f32 %v926, %v928
      %s930 = scalar_lea.vmem %s200, 60
      %v931 = vld [vmem:[%s930] sm:$0xff]
      %v932 = vld [vmem:[%s930 + $0x8] sm:$0xf]
      %v933 = vunpack.c.l.bf16 %v931
      %v934 = vunpack.c.h.bf16 %v931
      %v935 = vunpack.c.l.bf16 %v932
      %v936 = vpack.c.bf16 %v929, %v929
      %937 = vmatprep.subr.bf16.mxu0 %v344
      %938 = vmatpush1.bf16.msra.mxu0 %v343
      %939 = vmatprep.subr.bf16.mxu0 %v347
      %940 = vmatpush1.bf16.msra.mxu0 %v346
      %941 = vmatprep.subr.bf16.mxu0 %v350
      %942 = vmatpush1.bf16.msra.mxu0 %v349
      %943 = vmatprep.subr.bf16.mxu0 %v353
      %944 = vmatpush1.bf16.msra.mxu0 %v352
      %945 = vmatprep.subr.bf16.mxu0 %v356
      %946 = vmatpush1.bf16.msra.mxu0 %v355
      %947 = vmatprep.subr.bf16.mxu0 %v359
      %948 = vmatpush1.bf16.msra.mxu0 %v358
      %949 = vmatprep.subr.bf16.mxu0 %v362
      %950 = vmatpush1.bf16.msra.mxu0 %v361
      %951 = vmatprep.subr.bf16.mxu0 %v365
      %952 = vmatpush1.bf16.msra.mxu0 %v364
      %953 = vmatprep.subr.bf16.mxu0 0
      %954 = vmatpush1.bf16.msra.mxu0 0
      %955 = vmatprep.subr.bf16.mxu0 0
      %956 = vmatpush1.bf16.msra.mxu0 0
      %957 = vmatprep.subr.bf16.mxu0 0
      %958 = vmatpush1.bf16.msra.mxu0 0
      %959 = vmatprep.subr.bf16.mxu0 0
      %960 = vmatpush1.bf16.msra.mxu0 0
      %961 = vmatprep.subr.bf16.mxu0 0
      %962 = vmatpush1.bf16.msra.mxu0 0
      %963 = vmatprep.subr.bf16.mxu0 0
      %964 = vmatpush1.bf16.msra.mxu0 0
      %965 = vmatprep.subr.bf16.mxu0 0
      %966 = vmatpush1.bf16.msra.mxu0 0
      %967 = vmatprep.subr.bf16.mxu0 0
      %968 = vmatpush1.bf16.msra.mxu0 0
      %969 = vmatprep.mubr.bf16.mxu0 0
      %970 = vmatmul.mubr.bf16.gmra.mrb[0].mxu0 %v936
      %v971 = vpop.f32.mrb[0].mxu0
      %v972 = vadd.f32 0.0, %v971
      %v973 = vpop.f32.mrb[0].mxu0
      %v974 = vadd.f32 0.0, %v973
      %v975 = vpop.f32.mrb[0].mxu0
      %v976 = vpop.f32.mrb[0].mxu0
      %977 = vdwg.mxu0
      %978 = vmatprep.subr.bf16.mxu0 0
      %979 = vmatpush1.bf16.msra.mxu0 %v345
      %980 = vmatprep.subr.bf16.mxu0 0
      %981 = vmatpush1.bf16.msra.mxu0 %v348
      %982 = vmatprep.subr.bf16.mxu0 0
      %983 = vmatpush1.bf16.msra.mxu0 %v351
      %984 = vmatprep.subr.bf16.mxu0 0
      %985 = vmatpush1.bf16.msra.mxu0 %v354
      %986 = vmatprep.subr.bf16.mxu0 0
      %987 = vmatpush1.bf16.msra.mxu0 %v357
      %988 = vmatprep.subr.bf16.mxu0 0
      %989 = vmatpush1.bf16.msra.mxu0 %v360
      %990 = vmatprep.subr.bf16.mxu0 0
      %991 = vmatpush1.bf16.msra.mxu0 %v363
      %992 = vmatprep.subr.bf16.mxu0 0
      %993 = vmatpush1.bf16.msra.mxu0 %v366
      %994 = vmatprep.subr.bf16.mxu0 0
      %995 = vmatpush1.bf16.msra.mxu0 0
      %996 = vmatprep.subr.bf16.mxu0 0
      %997 = vmatpush1.bf16.msra.mxu0 0
      %998 = vmatprep.subr.bf16.mxu0 0
      %999 = vmatpush1.bf16.msra.mxu0 0
      %1000 = vmatprep.subr.bf16.mxu0 0
      %1001 = vmatpush1.bf16.msra.mxu0 0
      %1002 = vmatprep.subr.bf16.mxu0 0
      %1003 = vmatpush1.bf16.msra.mxu0 0
      %1004 = vmatprep.subr.bf16.mxu0 0
      %1005 = vmatpush1.bf16.msra.mxu0 0
      %1006 = vmatprep.subr.bf16.mxu0 0
      %1007 = vmatpush1.bf16.msra.mxu0 0
      %1008 = vmatprep.subr.bf16.mxu0 0
      %1009 = vmatpush1.bf16.msra.mxu0 0
      %1010 = vmatprep.mubr.bf16.mxu0 0
      %1011 = vmatmul.mubr.bf16.gmra.mrb[0].mxu0 %v936
      %v1012 = vpop.f32.mrb[0].mxu0
      %v1013 = vadd.f32 0.0, %v1012
      %v1014 = vpop.f32.mrb[0].mxu0
      %v1015 = vpop.f32.mrb[0].mxu0
      %v1016 = vpop.f32.mrb[0].mxu0
      %1017 = vdwg.mxu0
      %v1018 = vadd.f32 %v933, %v972
      %v1019 = vxor.u32 %v1018, 2147483648
      %v1020 = vmul.f32 %v1019, 1.442695
      %v1021 = vpow.pop %v1020
      %v1022 = vadd.f32 %v1021, 1.0
      %v1023 = vrcp.pop %v1022
      %v1024 = vmul.f32 1.0, %v1023
      %v1025 = vadd.f32 %v934, %v974
      %v1026 = vxor.u32 %v1025, 2147483648
      %v1027 = vmul.f32 %v1026, 1.442695
      %v1028 = vpow.pop %v1027
      %v1029 = vadd.f32 %v1028, 1.0
      %v1030 = vrcp.pop %v1029
      %v1031 = vmul.f32 1.0, %v1030
      %v1032 = vadd.f32 %v1013, %v254
      %v1033 = vmul.f32 %v1024, %v1032
      %v1034 = vadd.f32 %v935, %v1033
      %v1035 = vtanh.pop %v1034
      %v1036 = vsub.f32 %v929, %v1035
      %v1037 = vmul.f32 %v1031, %v1036
      %v1038 = vadd.f32 %v1035, %v1037
      %s1039 = scalar_lea.vmem %s200, 72
      %v1040 = vld [vmem:[%s1039] sm:$0xff]
      %v1041 = vld [vmem:[%s1039 + $0x8] sm:$0xf]
      %v1042 = vunpack.c.l.bf16 %v1040
      %v1043 = vunpack.c.h.bf16 %v1040
      %v1044 = vunpack.c.l.bf16 %v1041
      %v1045 = vpack.c.bf16 %v1038, %v1038
      %1046 = vmatprep.subr.bf16.mxu0 %v344
      %1047 = vmatpush1.bf16.msra.mxu0 %v343
      %1048 = vmatprep.subr.bf16.mxu0 %v347
      %1049 = vmatpush1.bf16.msra.mxu0 %v346
      %1050 = vmatprep.subr.bf16.mxu0 %v350
      %1051 = vmatpush1.bf16.msra.mxu0 %v349
      %1052 = vmatprep.subr.bf16.mxu0 %v353
      %1053 = vmatpush1.bf16.msra.mxu0 %v352
      %1054 = vmatprep.subr.bf16.mxu0 %v356
      %1055 = vmatpush1.bf16.msra.mxu0 %v355
      %1056 = vmatprep.subr.bf16.mxu0 %v359
      %1057 = vmatpush1.bf16.msra.mxu0 %v358
      %1058 = vmatprep.subr.bf16.mxu0 %v362
      %1059 = vmatpush1.bf16.msra.mxu0 %v361
      %1060 = vmatprep.subr.bf16.mxu0 %v365
      %1061 = vmatpush1.bf16.msra.mxu0 %v364
      %1062 = vmatprep.subr.bf16.mxu0 0
      %1063 = vmatpush1.bf16.msra.mxu0 0
      %1064 = vmatprep.subr.bf16.mxu0 0
      %1065 = vmatpush1.bf16.msra.mxu0 0
      %1066 = vmatprep.subr.bf16.mxu0 0
      %1067 = vmatpush1.bf16.msra.mxu0 0
      %1068 = vmatprep.subr.bf16.mxu0 0
      %1069 = vmatpush1.bf16.msra.mxu0 0
      %1070 = vmatprep.subr.bf16.mxu0 0
      %1071 = vmatpush1.bf16.msra.mxu0 0
      %1072 = vmatprep.subr.bf16.mxu0 0
      %1073 = vmatpush1.bf16.msra.mxu0 0
      %1074 = vmatprep.subr.bf16.mxu0 0
      %1075 = vmatpush1.bf16.msra.mxu0 0
      %1076 = vmatprep.subr.bf16.mxu0 0
      %1077 = vmatpush1.bf16.msra.mxu0 0
      %1078 = vmatprep.mubr.bf16.mxu0 0
      %1079 = vmatmul.mubr.bf16.gmra.mrb[0].mxu0 %v1045
      %v1080 = vpop.f32.mrb[0].mxu0
      %v1081 = vadd.f32 0.0, %v1080
      %v1082 = vpop.f32.mrb[0].mxu0
      %v1083 = vadd.f32 0.0, %v1082
      %v1084 = vpop.f32.mrb[0].mxu0
      %v1085 = vpop.f32.mrb[0].mxu0
      %1086 = vdwg.mxu0
      %1087 = vmatprep.subr.bf16.mxu0 0
      %1088 = vmatpush1.bf16.msra.mxu0 %v345
      %1089 = vmatprep.subr.bf16.mxu0 0
      %1090 = vmatpush1.bf16.msra.mxu0 %v348
      %1091 = vmatprep.subr.bf16.mxu0 0
      %1092 = vmatpush1.bf16.msra.mxu0 %v351
      %1093 = vmatprep.subr.bf16.mxu0 0
      %1094 = vmatpush1.bf16.msra.mxu0 %v354
      %1095 = vmatprep.subr.bf16.mxu0 0
      %1096 = vmatpush1.bf16.msra.mxu0 %v357
      %1097 = vmatprep.subr.bf16.mxu0 0
      %1098 = vmatpush1.bf16.msra.mxu0 %v360
      %1099 = vmatprep.subr.bf16.mxu0 0
      %1100 = vmatpush1.bf16.msra.mxu0 %v363
      %1101 = vmatprep.subr.bf16.mxu0 0
      %1102 = vmatpush1.bf16.msra.mxu0 %v366
      %1103 = vmatprep.subr.bf16.mxu0 0
      %1104 = vmatpush1.bf16.msra.mxu0 0
      %1105 = vmatprep.subr.bf16.mxu0 0
      %1106 = vmatpush1.bf16.msra.mxu0 0
      %1107 = vmatprep.subr.bf16.mxu0 0
      %1108 = vmatpush1.bf16.msra.mxu0 0
      %1109 = vmatprep.subr.bf16.mxu0 0
      %1110 = vmatpush1.bf16.msra.mxu0 0
      %1111 = vmatprep.subr.bf16.mxu0 0
      %1112 = vmatpush1.bf16.msra.mxu0 0
      %1113 = vmatprep.subr.bf16.mxu0 0
      %1114 = vmatpush1.bf16.msra.mxu0 0
      %1115 = vmatprep.subr.bf16.mxu0 0
      %1116 = vmatpush1.bf16.msra.mxu0 0
      %1117 = vmatprep.subr.bf16.mxu0 0
      %1118 = vmatpush1.bf16.msra.mxu0 0
      %1119 = vmatprep.mubr.bf16.mxu0 0
      %1120 = vmatmul.mubr.bf16.gmra.mrb[0].mxu0 %v1045
      %v1121 = vpop.f32.mrb[0].mxu0
      %v1122 = vadd.f32 0.0, %v1121
      %v1123 = vpop.f32.mrb[0].mxu0
      %v1124 = vpop.f32.mrb[0].mxu0
      %v1125 = vpop.f32.mrb[0].mxu0
      %1126 = vdwg.mxu0
      %v1127 = vadd.f32 %v1042, %v1081
      %v1128 = vxor.u32 %v1127, 2147483648
      %v1129 = vmul.f32 %v1128, 1.442695
      %v1130 = vpow.pop %v1129
      %v1131 = vadd.f32 %v1130, 1.0
      %v1132 = vrcp.pop %v1131
      %v1133 = vmul.f32 1.0, %v1132
      %v1134 = vadd.f32 %v1043, %v1083
      %v1135 = vxor.u32 %v1134, 2147483648
      %v1136 = vmul.f32 %v1135, 1.442695
      %v1137 = vpow.pop %v1136
      %v1138 = vadd.f32 %v1137, 1.0
      %v1139 = vrcp.pop %v1138
      %v1140 = vmul.f32 1.0, %v1139
      %v1141 = vadd.f32 %v1122, %v254
      %v1142 = vmul.f32 %v1133, %v1141
      %v1143 = vadd.f32 %v1044, %v1142
      %v1144 = vtanh.pop %v1143
      %v1145 = vsub.f32 %v1038, %v1144
      %v1146 = vmul.f32 %v1140, %v1145
      %v1147 = vadd.f32 %v1144, %v1146
      %s1148 = scalar_lea.vmem %s200, 84
      %v1149 = vld [vmem:[%s1148] sm:$0xff]
      %v1150 = vld [vmem:[%s1148 + $0x8] sm:$0xf]
      %v1151 = vunpack.c.l.bf16 %v1149
      %v1152 = vunpack.c.h.bf16 %v1149
      %v1153 = vunpack.c.l.bf16 %v1150
      %v1154 = vpack.c.bf16 %v1147, %v1147
      %1155 = vmatprep.subr.bf16.mxu0 %v344
      %1156 = vmatpush1.bf16.msra.mxu0 %v343
      %1157 = vmatprep.subr.bf16.mxu0 %v347
      %1158 = vmatpush1.bf16.msra.mxu0 %v346
      %1159 = vmatprep.subr.bf16.mxu0 %v350
      %1160 = vmatpush1.bf16.msra.mxu0 %v349
      %1161 = vmatprep.subr.bf16.mxu0 %v353
      %1162 = vmatpush1.bf16.msra.mxu0 %v352
      %1163 = vmatprep.subr.bf16.mxu0 %v356
      %1164 = vmatpush1.bf16.msra.mxu0 %v355
      %1165 = vmatprep.subr.bf16.mxu0 %v359
      %1166 = vmatpush1.bf16.msra.mxu0 %v358
      %1167 = vmatprep.subr.bf16.mxu0 %v362
      %1168 = vmatpush1.bf16.msra.mxu0 %v361
      %1169 = vmatprep.subr.bf16.mxu0 %v365
      %1170 = vmatpush1.bf16.msra.mxu0 %v364
      %1171 = vmatprep.subr.bf16.mxu0 0
      %1172 = vmatpush1.bf16.msra.mxu0 0
      %1173 = vmatprep.subr.bf16.mxu0 0
      %1174 = vmatpush1.bf16.msra.mxu0 0
      %1175 = vmatprep.subr.bf16.mxu0 0
      %1176 = vmatpush1.bf16.msra.mxu0 0
      %1177 = vmatprep.subr.bf16.mxu0 0
      %1178 = vmatpush1.bf16.msra.mxu0 0
      %1179 = vmatprep.subr.bf16.mxu0 0
      %1180 = vmatpush1.bf16.msra.mxu0 0
      %1181 = vmatprep.subr.bf16.mxu0 0
      %1182 = vmatpush1.bf16.msra.mxu0 0
      %1183 = vmatprep.subr.bf16.mxu0 0
      %1184 = vmatpush1.bf16.msra.mxu0 0
      %1185 = vmatprep.subr.bf16.mxu0 0
      %1186 = vmatpush1.bf16.msra.mxu0 0
      %1187 = vmatprep.mubr.bf16.mxu0 0
      %1188 = vmatmul.mubr.bf16.gmra.mrb[0].mxu0 %v1154
      %v1189 = vpop.f32.mrb[0].mxu0
      %v1190 = vadd.f32 0.0, %v1189
      %v1191 = vpop.f32.mrb[0].mxu0
      %v1192 = vadd.f32 0.0, %v1191
      %v1193 = vpop.f32.mrb[0].mxu0
      %v1194 = vpop.f32.mrb[0].mxu0
      %1195 = vdwg.mxu0
      %1196 = vmatprep.subr.bf16.mxu0 0
      %1197 = vmatpush1.bf16.msra.mxu0 %v345
      %1198 = vmatprep.subr.bf16.mxu0 0
      %1199 = vmatpush1.bf16.msra.mxu0 %v348
      %1200 = vmatprep.subr.bf16.mxu0 0
      %1201 = vmatpush1.bf16.msra.mxu0 %v351
      %1202 = vmatprep.subr.bf16.mxu0 0
      %1203 = vmatpush1.bf16.msra.mxu0 %v354
      %1204 = vmatprep.subr.bf16.mxu0 0
      %1205 = vmatpush1.bf16.msra.mxu0 %v357
      %1206 = vmatprep.subr.bf16.mxu0 0
      %1207 = vmatpush1.bf16.msra.mxu0 %v360
      %1208 = vmatprep.subr.bf16.mxu0 0
      %1209 = vmatpush1.bf16.msra.mxu0 %v363
      %1210 = vmatprep.subr.bf16.mxu0 0
      %1211 = vmatpush1.bf16.msra.mxu0 %v366
      %1212 = vmatprep.subr.bf16.mxu0 0
      %1213 = vmatpush1.bf16.msra.mxu0 0
      %1214 = vmatprep.subr.bf16.mxu0 0
      %1215 = vmatpush1.bf16.msra.mxu0 0
      %1216 = vmatprep.subr.bf16.mxu0 0
      %1217 = vmatpush1.bf16.msra.mxu0 0
      %1218 = vmatprep.subr.bf16.mxu0 0
      %1219 = vmatpush1.bf16.msra.mxu0 0
      %1220 = vmatprep.subr.bf16.mxu0 0
      %1221 = vmatpush1.bf16.msra.mxu0 0
      %1222 = vmatprep.subr.bf16.mxu0 0
      %1223 = vmatpush1.bf16.msra.mxu0 0
      %1224 = vmatprep.subr.bf16.mxu0 0
      %1225 = vmatpush1.bf16.msra.mxu0 0
      %1226 = vmatprep.subr.bf16.mxu0 0
      %1227 = vmatpush1.bf16.msra.mxu0 0
      %1228 = vmatprep.mubr.bf16.mxu0 0
      %1229 = vmatmul.mubr.bf16.gmra.mrb[0].mxu0 %v1154
      %v1230 = vpop.f32.mrb[0].mxu0
      %v1231 = vadd.f32 0.0, %v1230
      %v1232 = vpop.f32.mrb[0].mxu0
      %v1233 = vpop.f32.mrb[0].mxu0
      %v1234 = vpop.f32.mrb[0].mxu0
      %1235 = vdwg.mxu0
      %v1236 = vadd.f32 %v1151, %v1190
      %v1237 = vxor.u32 %v1236, 2147483648
      %v1238 = vmul.f32 %v1237, 1.442695
      %v1239 = vpow.pop %v1238
      %v1240 = vadd.f32 %v1239, 1.0
      %v1241 = vrcp.pop %v1240
      %v1242 = vmul.f32 1.0, %v1241
      %v1243 = vadd.f32 %v1152, %v1192
      %v1244 = vxor.u32 %v1243, 2147483648
      %v1245 = vmul.f32 %v1244, 1.442695
      %v1246 = vpow.pop %v1245
      %v1247 = vadd.f32 %v1246, 1.0
      %v1248 = vrcp.pop %v1247
      %v1249 = vmul.f32 1.0, %v1248
      %v1250 = vadd.f32 %v1231, %v254
      %v1251 = vmul.f32 %v1242, %v1250
      %v1252 = vadd.f32 %v1153, %v1251
      %v1253 = vtanh.pop %v1252
      %v1254 = vsub.f32 %v1147, %v1253
      %v1255 = vmul.f32 %v1249, %v1254
      %v1256 = vadd.f32 %v1253, %v1255
      %s1257 = scalar_lea.vmem %s209, 8
      %1258 = vst [vmem:[%s1257] sm:$0xff] %v1256
      %1259 = vst [vmem:[#allocation2] sm:$0xff] %v1256
      %s1260 = smul.u32 2, %s19
      %p1261 = scmp.lt.s32.totalorder %s1260, 3
      %s1262 = scalar_select %p1261, %s1260, 3
      %p1263 = scmp.lt.s32.totalorder %s18, 0
      %s1264 = scalar_select %p1263, %s18, 0
      %s1265 = sadd.s32 %s1264, %s1262
      %s1266 = smul.addr %s1265, 8
      %s1267 = scalar_lea.vmem %s3, %s1266
      // Predicated region
      $region37: #{input_module_forward.1} parent=31 // pred_check
        %p1268 = pneg %p116
      $region38: #{input_module_forward.1} parent=31 // pred_check_branch
        %1270 = sbr.rel (%p1268) target = $region40
      $region39: #{input_module_forward.1} parent=31 // pred_region
        %s1271 = smul.u32 2, %s19
      $region40: #{input_module_forward.1} parent=31 // pred_fallthru
        _
    $region32: #{input_module_forward.1} parent=5 // pred_fallthru
      _
    %p1272 = scmp.le.s32.totalorder 2, %s9
    // Predicated region
    $region41: #{input_module_forward.1} parent=5 // pred_check
      %p1273 = pneg %p1272
    $region42: #{input_module_forward.1} parent=5 // pred_check_branch
      %1275 = sbr.rel (%p1273) target = $region44
    $region43: #{input_module_forward.1} parent=5 // pred_region
      %s1276 = ssub.s32 %s9, 2
      // Predicated region
      $region45: #{input_module_forward.1} parent=43 // pred_check
        %p1277 = pneg %p122
      $region46: #{input_module_forward.1} parent=43 // pred_check_branch
        %1279 = sbr.rel (%p1277) target = $region48
      $region47: #{input_module_forward.1} parent=43 // pred_region
        %s1280 = smul.u32 2, %s21
        %p1281 = scmp.lt.s32.totalorder %s1280, 3
        %s1282 = scalar_select %p1281, %s1280, 3
        %p1283 = scmp.lt.s32.totalorder %s20, 0
        %s1284 = scalar_select %p1283, %s20, 0
        %s1285 = sadd.s32 %s1284, %s1282
        %s1286 = smul.addr %s1285, 8
        %s1287 = scalar_lea.vmem %s3, %s1286
      $region48: #{input_module_forward.1} parent=43 // pred_fallthru
        _
    $region44: #{input_module_forward.1} parent=5 // pred_fallthru
      _
  $region6: #{input_module_forward.1} parent=0 // loop_footer
    %s13 = sadd.s32 1, %s9
  $region7: #{input_module_forward.1} parent=0 // loop_footer_branch
    %8 = sbr.rel target = $region3
  $region8: #{input_module_forward.1} parent=0 // loop_exit
    _

</llo_original>
